<compile_context>
chip_gen: v5e
topology: v5e:2x2
jax: 0.10.0
libtpu: 0.0.40
codegen_flags: <defaults>
</compile_context>

<pallas_src>
import math
import functools
import numpy as np
import jax
import jax.numpy as jnp
from jax import lax
from jax.experimental import pallas as pl
from jax.experimental.pallas import tpu as pltpu

_BIG = 1e12


def _egp_kernel(x_ref, w1_ref, b1_ref, w2e_t_ref, w2o_ref, b2e_ref, b2o_ref,
                cos_ref, sin_ref, mask_ref, out_ref,
                qrot_sc, krot_sc, bias_e_sc, bias_o_sc,
                *, hidden_size, output_size, tile_q):
    H, C, TQ = hidden_size, output_size, tile_q
    S = cos_ref.shape[0]                                    # padded sequence length
    t = pl.program_id(1)

    # Whole-sequence features computed once per batch row (t == 0), kept in VMEM scratch
    # and reused by every query tile of this batch row.
    @pl.when(t == 0)
    def _():
        # fused linear_1 (single wide MXU matmul), f32 accumulation.
        h = jnp.dot(x_ref[0], w1_ref[...],
                    preferred_element_type=jnp.float32) + b1_ref[...]       # (S, 2H)
        cos = cos_ref[...]                                                  # (S, H)
        sin = sin_ref[...]                                                  # (S, H), signed

        # RoPE in rotate-half form; 1/sqrt(H) folded into the tables (H**-0.25 per side).
        def rope(v):
            half = H // 2
            rot = jnp.concatenate([v[:, half:], v[:, :half]], axis=-1)
            return v * cos + rot * sin

        qrot_sc[...] = rope(h[:, :H]).astype(jnp.bfloat16)                  # (S, H)
        krot_sc[...] = rope(h[:, H:]).astype(jnp.bfloat16)                  # (S, H)

        # linear_2 bias terms (0.5 folded into packed weights/biases):
        #   even channels -> indexed by key position   -> (C, S) layout
        #   odd  channels -> indexed by query position -> (S, C) layout
        h_b = h.astype(jnp.bfloat16)
        bias_e_sc[...] = lax.dot_general(w2e_t_ref[...], h_b,
                                         (((1,), (1,)), ((), ())),
                                         preferred_element_type=jnp.float32) + b2e_ref[...]
        bias_o_sc[...] = jnp.dot(h_b, w2o_ref[...],
                                 preferred_element_type=jnp.float32) + b2o_ref[...]

    q0 = pl.multiple_of(t * TQ, TQ)                          # global row offset of this tile

    # qk[m, n] = sum_d qrot[m, d] * krot[n, d]  (NT form, no explicit transpose)
    qrot = qrot_sc[pl.ds(q0, TQ), :]                         # (TQ, H) bf16
    qk = lax.dot_general(qrot, krot_sc[...], (((1,), (1,)), ((), ())),
                         preferred_element_type=jnp.float32)                # (TQ, S)

    bias_e = bias_e_sc[...]                                  # (C, S)
    bias_o = bias_o_sc[pl.ds(q0, TQ), :]                     # (TQ, C)

    # combined pad + strict-lower-triangular penalty, shared across all channels.
    m = mask_ref[0]                                          # (1, S), 1 = keep
    row = q0 + lax.broadcasted_iota(jnp.int32, (TQ, S), 0)
    col = lax.broadcasted_iota(jnp.int32, (TQ, S), 1)
    pen = (1.0 - m) * _BIG + jnp.where(row > col,
                                       jnp.float32(_BIG), jnp.float32(0.0))  # (TQ, S)

    # fused per-channel epilogue: a single pass / single lane-dense store per (TQ, S) plane.
    for c in range(C):                                       # C is small -> static unroll
        out_ref[0, c] = ((qk + bias_e[c:c + 1, :] + bias_o[:, c:c + 1]) * m
                         - pen).astype(out_ref.dtype)


def _rope_tables(seq_len, hidden_size):
    """Sinusoid tables re-laid-out for rotate-half, with H**-0.25 folded in."""
    pos = np.arange(seq_len, dtype=np.float32)[:, None]
    div = np.exp(np.arange(0, hidden_size, 2, dtype=np.float32)
                 * -(math.log(10000.0) / hidden_size))
    ang = pos * div[None, :]                                 # (S, H/2)
    scale = float(hidden_size) ** -0.25                      # (H**-0.25)^2 = 1/sqrt(H) on qk
    cos, sin = np.cos(ang) * scale, np.sin(ang) * scale
    cos_full = np.concatenate([cos, cos], axis=-1).astype(np.float32)      # (S, H)
    sin_signed = np.concatenate([-sin, sin], axis=-1).astype(np.float32)   # (S, H)
    return jnp.asarray(cos_full), jnp.asarray(sin_signed)


def _prepack_params(W1, b1, W2, b2, hidden_size):
    """Re-order weights so the kernel works on contiguous rotate-half q/k halves."""
    H = hidden_size
    # qw feature i = linear_1 column 2i, kw feature i = column 2i+1.  Within each,
    # move interleaved RoPE pairs (2i, 2i+1) into rotate-half positions (i, H/2+i).
    qperm = np.concatenate([np.arange(0, H, 2), np.arange(1, H, 2)])
    q_cols = 2 * qperm
    k_cols = 2 * qperm + 1
    order = np.concatenate([q_cols, k_cols])                 # packed h layout: [hq | hk]
    W1p = W1[:, order]                                       # (Din, 2H)
    b1p = b1[order][None, :]                                 # (1, 2H)
    W2p = W2[order, :]                                       # rows match packed h layout
    W2e_t = (W2p[:, 0::2] * 0.5).T                           # (C, 2H)  even (start) channels
    W2o = W2p[:, 1::2] * 0.5                                 # (2H, C)  odd  (end) channels
    b2e = (b2[0::2] * 0.5)[:, None]                          # (C, 1)
    b2o = (b2[1::2] * 0.5)[None, :]                          # (1, C)
    return W1p, b1p, W2e_t, W2o, b2e, b2o


def _pick_tile_q(s_pad, c, budget_bytes=12 << 20):
    """Largest multiple of 128 dividing s_pad whose double-buffered f32 out block fits."""
    k = s_pad // 128
    best = 128
    for d in range(1, k + 1):
        if k % d == 0 and 2 * c * (d * 128) * s_pad * 4 <= budget_bytes:
            best = d * 128
    return best


def efficient_global_pointer(x, mask, W1, b1, W2, b2, hidden_size, output_size,
                             *, compute_dtype=jnp.bfloat16, out_dtype=jnp.float32):
    B, S, Din = x.shape
    H, C = hidden_size, output_size

    # Pad the sequence to a lane-dense multiple of 128; padded key positions get
    # mask=0 (-> -1e12), padded rows/cols are cropped from the returned logits.
    S_pad = ((S + 127) // 128) * 128
    if mask is None:
        mask = jnp.ones((B, S), jnp.float32)
    mask = mask.astype(jnp.float32)
    mask_p = jnp.zeros((B, 1, S_pad), jnp.float32).at[:, 0, :S].set(mask)
    x_p = jnp.zeros((B, S_pad, Din), compute_dtype).at[:, :S, :].set(
        x.astype(compute_dtype))

    W1p, b1p, W2e_t, W2o, b2e, b2o = _prepack_params(
        np.asarray(W1, np.float32), np.asarray(b1, np.float32),
        np.asarray(W2, np.float32), np.asarray(b2, np.float32), H)
    W1p = jnp.asarray(W1p, compute_dtype)
    W2e_t = jnp.asarray(W2e_t, compute_dtype)
    W2o = jnp.asarray(W2o, compute_dtype)
    b1p = jnp.asarray(b1p, jnp.float32)
    b2e = jnp.asarray(b2e, jnp.float32)
    b2o = jnp.asarray(b2o, jnp.float32)
    cos_t, sin_t = _rope_tables(S_pad, H)

    TQ = _pick_tile_q(S_pad, C)
    n_tq = S_pad // TQ

    kernel = functools.partial(_egp_kernel, hidden_size=H, output_size=C, tile_q=TQ)

    def const_spec(shape):
        nd = len(shape)
        return pl.BlockSpec(shape, lambda *_, nd=nd: (0,) * nd)

    out_bytes = np.dtype(out_dtype).itemsize * B * C * S_pad * S_pad
    in_bytes = (np.dtype(compute_dtype).itemsize * B * S_pad * Din + 4 * B * S_pad)
    flops = (2 * B * S_pad * Din * 2 * H            # linear_1 (once per batch row)
             + 2 * B * S_pad * 2 * H * 2 * C        # linear_2 bias terms
             + 2 * B * S_pad * S_pad * H            # qk
             + 8 * B * C * S_pad * S_pad)           # epilogue

    out = pl.pallas_call(
        kernel,
        out_shape=jax.ShapeDtypeStruct((B, C, S_pad, S_pad), out_dtype),
        grid=(B, n_tq),
        in_specs=[
            pl.BlockSpec((1, S_pad, Din), lambda b, t: (b, 0, 0)),   # x, full sequence
            const_spec((Din, 2 * H)), const_spec((1, 2 * H)),        # W1 packed, b1 packed
            const_spec((C, 2 * H)), const_spec((2 * H, C)),          # W2 even (T), W2 odd
            const_spec((C, 1)), const_spec((1, C)),                  # b2 even, b2 odd
            const_spec((S_pad, H)), const_spec((S_pad, H)),          # cos / signed sin
            pl.BlockSpec((1, 1, S_pad), lambda b, t: (b, 0, 0)),     # pad mask
        ],
        out_specs=pl.BlockSpec((1, C, TQ, S_pad), lambda b, t: (b, 0, t, 0)),
        scratch_shapes=[
            pltpu.VMEM((S_pad, H), jnp.bfloat16),                    # rotated q features
            pltpu.VMEM((S_pad, H), jnp.bfloat16),                    # rotated k features
            pltpu.VMEM((C, S_pad), jnp.float32),                     # key-indexed bias
            pltpu.VMEM((S_pad, C), jnp.float32),                     # query-indexed bias
        ],
        compiler_params=pltpu.CompilerParams(
            dimension_semantics=("parallel", "arbitrary"),
            vmem_limit_bytes=48 * 1024 * 1024),
        cost_estimate=pl.CostEstimate(flops=int(flops), transcendentals=0,
                                      bytes_accessed=int(out_bytes + in_bytes)),
    )(x_p, W1p, b1p, W2e_t, W2o, b2e, b2o, cos_t, sin_t, mask_p)
    return out[:, :, :S, :S]


def reference(x, mask, W1, b1, W2, b2, hidden_size, output_size):
    """Pure-JAX (f32) transcription of the PyTorch forward, for validation."""
    H = hidden_size
    B, S, _ = x.shape
    inputs = x @ W1 + b1
    qw, kw = inputs[..., 0::2], inputs[..., 1::2]
    pos = jnp.arange(S, dtype=jnp.float32)[:, None]
    div = jnp.exp(jnp.arange(0, H, 2, dtype=jnp.float32) * -(math.log(10000.0) / H))
    ang = pos * div[None, :]
    cos = jnp.repeat(jnp.cos(ang), 2, axis=-1)
    sin = jnp.repeat(jnp.sin(ang), 2, axis=-1)

    def rope(t):
        t2 = jnp.stack([-t[..., 1::2], t[..., 0::2]], axis=-1).reshape(t.shape)
        return t * cos + t2 * sin

    qw, kw = rope(qw), rope(kw)
    logits = jnp.einsum('bmd,bnd->bmn', qw, kw) / (H ** 0.5)
    bias = jnp.swapaxes(inputs @ W2 + b2, 1, 2) / 2
    logits = logits[:, None] + bias[:, 0::2, None, :] + bias[:, 1::2, :, None]
    if mask is not None:
        pad = mask.astype(jnp.float32)[:, None, None, :]
        logits = logits * pad - (1 - pad) * 1e12
    tril = jnp.tril(jnp.ones((S, S), jnp.float32), -1)
    logits = logits - tril[None, None] * 1e12
    return logits


if __name__ == "__main__":
    B, S = 2, 8
    input_size, hidden_size, output_size = 32, 16, 4

    key = jax.random.PRNGKey(0)
    kx, k1, k2, k3, k4 = jax.random.split(key, 5)
    x = jax.random.normal(kx, (B, S, input_size), jnp.float32)

    # deterministic "linear layer" parameters (torch-style uniform bounds)
    bound1 = 1.0 / math.sqrt(input_size)
    W1 = jax.random.uniform(k1, (input_size, 2 * hidden_size), jnp.float32, -bound1, bound1)
    b1 = jax.random.uniform(k2, (2 * hidden_size,), jnp.float32, -bound1, bound1)
    bound2 = 1.0 / math.sqrt(2 * hidden_size)
    W2 = jax.random.uniform(k3, (2 * hidden_size, 2 * output_size), jnp.float32, -bound2, bound2)
    b2 = jax.random.uniform(k4, (2 * output_size,), jnp.float32, -bound2, bound2)

    lengths = jnp.array([6, 8])
    mask = (jnp.arange(S)[None, :] < lengths[:, None]).astype(jnp.float32)

    out = efficient_global_pointer(x, mask, W1, b1, W2, b2, hidden_size, output_size)
    out = jax.block_until_ready(out)

    ref = reference(x, mask, W1, b1, W2, b2, hidden_size, output_size)
    # bf16 MXU operands in the kernel vs an f32 reference -> bf16-appropriate tolerance.
    # (masked/tril entries are exactly -1e12 / -2e12 in both.)
    np.testing.assert_allclose(np.asarray(out), np.asarray(ref), rtol=5e-2, atol=8e-2)
    print("KERNEL_OK")
</pallas_src>

<mosaic_0001>
module attributes {stable_mosaic.version = 11 : i64} {
  func.func @_egp_kernel(%arg0: i32, %arg1: i32, %arg2: memref<1x128x32xbf16, #tpu.memory_space<vmem>>, %arg3: memref<32x32xbf16, #tpu.memory_space<vmem>>, %arg4: memref<1x32xf32, #tpu.memory_space<vmem>>, %arg5: memref<4x32xbf16, #tpu.memory_space<vmem>>, %arg6: memref<32x4xbf16, #tpu.memory_space<vmem>>, %arg7: memref<4x1xf32, #tpu.memory_space<vmem>>, %arg8: memref<1x4xf32, #tpu.memory_space<vmem>>, %arg9: memref<128x16xf32, #tpu.memory_space<vmem>>, %arg10: memref<128x16xf32, #tpu.memory_space<vmem>>, %arg11: memref<1x1x128xf32, #tpu.memory_space<vmem>>, %arg12: memref<1x4x128x128xf32, #tpu.memory_space<vmem>>, %arg13: memref<128x16xbf16, #tpu.memory_space<vmem>>, %arg14: memref<128x16xbf16, #tpu.memory_space<vmem>>, %arg15: memref<4x128xf32, #tpu.memory_space<vmem>>, %arg16: memref<128x4xf32, #tpu.memory_space<vmem>>) attributes {dimension_semantics = [#tpu.dimension_semantics<parallel>, #tpu.dimension_semantics<arbitrary>], iteration_bounds = array<i64: 2, 1>, scalar_prefetch = 0 : i64, scratch_operands = 4 : i64, tpu.core_type = #tpu.core_type<tc>, window_params = [{transform_indices = @transform_0, window_bounds = array<i64: 1, 128, 32>}, {pipeline_mode = #tpu.pipeline_mode<synchronous>, transform_indices = @transform_1, window_bounds = array<i64: 32, 32>}, {pipeline_mode = #tpu.pipeline_mode<synchronous>, transform_indices = @transform_2, window_bounds = array<i64: 1, 32>}, {pipeline_mode = #tpu.pipeline_mode<synchronous>, transform_indices = @transform_3, window_bounds = array<i64: 4, 32>}, {pipeline_mode = #tpu.pipeline_mode<synchronous>, transform_indices = @transform_4, window_bounds = array<i64: 32, 4>}, {pipeline_mode = #tpu.pipeline_mode<synchronous>, transform_indices = @transform_5, window_bounds = array<i64: 4, 1>}, {pipeline_mode = #tpu.pipeline_mode<synchronous>, transform_indices = @transform_6, window_bounds = array<i64: 1, 4>}, {pipeline_mode = #tpu.pipeline_mode<synchronous>, transform_indices = @transform_7, window_bounds = array<i64: 128, 16>}, {pipeline_mode = #tpu.pipeline_mode<synchronous>, transform_indices = @transform_8, window_bounds = array<i64: 128, 16>}, {transform_indices = @transform_9, window_bounds = array<i64: 1, 1, 128>}, {transform_indices = @transform_10, window_bounds = array<i64: 1, 4, 128, 128>}]} {
    %c0_i32 = arith.constant 0 : i32
    %0 = arith.cmpi eq, %arg1, %c0_i32 : i32
    %1 = arith.extui %0 : i1 to i32
    %c0_i32_0 = arith.constant 0 : i32
    %2 = arith.cmpi ne, %1, %c0_i32_0 : i32
    scf.if %2 {
      %c0_26 = arith.constant 0 : index
      %c0_27 = arith.constant 0 : index
      %c0_28 = arith.constant 0 : index
      %76 = vector.load %arg2[%c0_26, %c0_27, %c0_28] : memref<1x128x32xbf16, #tpu.memory_space<vmem>>, vector<1x128x32xbf16>
      %77 = vector.shape_cast %76 : vector<1x128x32xbf16> to vector<128x32xbf16>
      %c0_29 = arith.constant 0 : index
      %c0_30 = arith.constant 0 : index
      %78 = vector.load %arg3[%c0_29, %c0_30] : memref<32x32xbf16, #tpu.memory_space<vmem>>, vector<32x32xbf16>
      %cst_31 = arith.constant dense<0.000000e+00> : vector<128x32xf32>
      %79 = tpu.matmul %77, %78, %cst_31 {dimension_numbers = #tpu.dot_dimension_numbers<[1], [0], [0], [1], [0, 0, 1, 1], [], []>} : vector<128x32xbf16>, vector<32x32xbf16>, vector<128x32xf32> -> vector<128x32xf32>
      %c0_32 = arith.constant 0 : index
      %c0_33 = arith.constant 0 : index
      %80 = vector.load %arg4[%c0_32, %c0_33] : memref<1x32xf32, #tpu.memory_space<vmem>>, vector<1x32xf32>
      %81 = vector.broadcast %80 : vector<1x32xf32> to vector<128x32xf32>
      %82 = arith.addf %79, %81 : vector<128x32xf32>
      %c0_34 = arith.constant 0 : index
      %c0_35 = arith.constant 0 : index
      %83 = vector.load %arg9[%c0_34, %c0_35] : memref<128x16xf32, #tpu.memory_space<vmem>>, vector<128x16xf32>
      %c0_36 = arith.constant 0 : index
      %c0_37 = arith.constant 0 : index
      %84 = vector.load %arg10[%c0_36, %c0_37] : memref<128x16xf32, #tpu.memory_space<vmem>>, vector<128x16xf32>
      %85 = vector.extract_strided_slice %82 {offsets = [0, 0], sizes = [128, 16], strides = [1, 1]} : vector<128x32xf32> to vector<128x16xf32>
      %86 = vector.extract_strided_slice %85 {offsets = [0, 8], sizes = [128, 8], strides = [1, 1]} : vector<128x16xf32> to vector<128x8xf32>
      %87 = vector.extract_strided_slice %85 {offsets = [0, 0], sizes = [128, 8], strides = [1, 1]} : vector<128x16xf32> to vector<128x8xf32>
      %88 = tpu.concatenate %86, %87 in 1 : vector<128x8xf32>, vector<128x8xf32> -> vector<128x16xf32>
      %89 = arith.mulf %85, %83 : vector<128x16xf32>
      %90 = arith.mulf %88, %84 : vector<128x16xf32>
      %91 = arith.addf %89, %90 : vector<128x16xf32>
      %92 = arith.truncf %91 : vector<128x16xf32> to vector<128x16xbf16>
      %c0_38 = arith.constant 0 : index
      %c0_39 = arith.constant 0 : index
      %93 = vector.load %arg13[%c0_38, %c0_39] : memref<128x16xbf16, #tpu.memory_space<vmem>>, vector<128x16xbf16>
      tpu.vector_store %arg13[%c0_38, %c0_39], %92 {strides = array<i32>} : memref<128x16xbf16, #tpu.memory_space<vmem>>, vector<128x16xbf16>,
      %94 = vector.extract_strided_slice %82 {offsets = [0, 16], sizes = [128, 16], strides = [1, 1]} : vector<128x32xf32> to vector<128x16xf32>
      %95 = vector.extract_strided_slice %94 {offsets = [0, 8], sizes = [128, 8], strides = [1, 1]} : vector<128x16xf32> to vector<128x8xf32>
      %96 = vector.extract_strided_slice %94 {offsets = [0, 0], sizes = [128, 8], strides = [1, 1]} : vector<128x16xf32> to vector<128x8xf32>
      %97 = tpu.concatenate %95, %96 in 1 : vector<128x8xf32>, vector<128x8xf32> -> vector<128x16xf32>
      %98 = arith.mulf %94, %83 : vector<128x16xf32>
      %99 = arith.mulf %97, %84 : vector<128x16xf32>
      %100 = arith.addf %98, %99 : vector<128x16xf32>
      %101 = arith.truncf %100 : vector<128x16xf32> to vector<128x16xbf16>
      %c0_40 = arith.constant 0 : index
      %c0_41 = arith.constant 0 : index
      %102 = vector.load %arg14[%c0_40, %c0_41] : memref<128x16xbf16, #tpu.memory_space<vmem>>, vector<128x16xbf16>
      tpu.vector_store %arg14[%c0_40, %c0_41], %101 {strides = array<i32>} : memref<128x16xbf16, #tpu.memory_space<vmem>>, vector<128x16xbf16>,
      %103 = arith.truncf %82 : vector<128x32xf32> to vector<128x32xbf16>
      %c0_42 = arith.constant 0 : index
      %c0_43 = arith.constant 0 : index
      %104 = vector.load %arg5[%c0_42, %c0_43] : memref<4x32xbf16, #tpu.memory_space<vmem>>, vector<4x32xbf16>
      %cst_44 = arith.constant dense<0.000000e+00> : vector<4x128xf32>
      %105 = tpu.matmul %104, %103, %cst_44 {dimension_numbers = #tpu.dot_dimension_numbers<[1], [1], [0], [0], [0, 0, 1, 0], [], []>} : vector<4x32xbf16>, vector<128x32xbf16>, vector<4x128xf32> -> vector<4x128xf32>
      %c0_45 = arith.constant 0 : index
      %c0_46 = arith.constant 0 : index
      %106 = vector.load %arg7[%c0_45, %c0_46] : memref<4x1xf32, #tpu.memory_space<vmem>>, vector<4x1xf32>
      %107 = vector.broadcast %106 : vector<4x1xf32> to vector<4x128xf32>
      %108 = arith.addf %105, %107 : vector<4x128xf32>
      %c0_47 = arith.constant 0 : index
      %c0_48 = arith.constant 0 : index
      %109 = vector.load %arg15[%c0_47, %c0_48] : memref<4x128xf32, #tpu.memory_space<vmem>>, vector<4x128xf32>
      tpu.vector_store %arg15[%c0_47, %c0_48], %108 {strides = array<i32>} : memref<4x128xf32, #tpu.memory_space<vmem>>, vector<4x128xf32>,
      %c0_49 = arith.constant 0 : index
      %c0_50 = arith.constant 0 : index
      %110 = vector.load %arg6[%c0_49, %c0_50] : memref<32x4xbf16, #tpu.memory_space<vmem>>, vector<32x4xbf16>
      %cst_51 = arith.constant dense<0.000000e+00> : vector<128x4xf32>
      %111 = tpu.matmul %103, %110, %cst_51 {dimension_numbers = #tpu.dot_dimension_numbers<[1], [0], [0], [1], [0, 0, 1, 1], [], []>} : vector<128x32xbf16>, vector<32x4xbf16>, vector<128x4xf32> -> vector<128x4xf32>
      %c0_52 = arith.constant 0 : index
      %c0_53 = arith.constant 0 : index
      %112 = vector.load %arg8[%c0_52, %c0_53] : memref<1x4xf32, #tpu.memory_space<vmem>>, vector<1x4xf32>
      %113 = vector.broadcast %112 : vector<1x4xf32> to vector<128x4xf32>
      %114 = arith.addf %111, %113 : vector<128x4xf32>
      %c0_54 = arith.constant 0 : index
      %c0_55 = arith.constant 0 : index
      %115 = vector.load %arg16[%c0_54, %c0_55] : memref<128x4xf32, #tpu.memory_space<vmem>>, vector<128x4xf32>
      tpu.vector_store %arg16[%c0_54, %c0_55], %114 {strides = array<i32>} : memref<128x4xf32, #tpu.memory_space<vmem>>, vector<128x4xf32>,
    } else {
    }
    %c128_i32 = arith.constant 128 : i32
    %3 = arith.muli %arg1, %c128_i32 : i32
    %4 = tpu.assume_multiple %3, 128 : i32
    %5 = arith.index_cast %4 : i32 to index
    %c0 = arith.constant 0 : index
    %6 = vector.load %arg13[%5, %c0] : memref<128x16xbf16, #tpu.memory_space<vmem>>, vector<128x16xbf16>
    %c0_1 = arith.constant 0 : index
    %c0_2 = arith.constant 0 : index
    %7 = vector.load %arg14[%c0_1, %c0_2] : memref<128x16xbf16, #tpu.memory_space<vmem>>, vector<128x16xbf16>
    %cst = arith.constant dense<0.000000e+00> : vector<128x128xf32>
    %8 = tpu.matmul %6, %7, %cst {dimension_numbers = #tpu.dot_dimension_numbers<[1], [1], [0], [0], [0, 0, 1, 0], [], []>} : vector<128x16xbf16>, vector<128x16xbf16>, vector<128x128xf32> -> vector<128x128xf32>
    %c0_3 = arith.constant 0 : index
    %c0_4 = arith.constant 0 : index
    %9 = vector.load %arg15[%c0_3, %c0_4] : memref<4x128xf32, #tpu.memory_space<vmem>>, vector<4x128xf32>
    %10 = arith.index_cast %4 : i32 to index
    %c0_5 = arith.constant 0 : index
    %11 = vector.load %arg16[%10, %c0_5] : memref<128x4xf32, #tpu.memory_space<vmem>>, vector<128x4xf32>
    %c0_6 = arith.constant 0 : index
    %c0_7 = arith.constant 0 : index
    %c0_8 = arith.constant 0 : index
    %12 = vector.load %arg11[%c0_6, %c0_7, %c0_8] : memref<1x1x128xf32, #tpu.memory_space<vmem>>, vector<1x1x128xf32>
    %13 = vector.shape_cast %12 : vector<1x1x128xf32> to vector<1x128xf32>
    %14 = tpu.iota {dimensions = array<i32: 0>} : vector<128x128xi32>
    %15 = vector.broadcast %4 : i32 to vector<128x128xi32>
    %16 = arith.addi %15, %14 : vector<128x128xi32>
    %17 = tpu.iota {dimensions = array<i32: 1>} : vector<128x128xi32>
    %cst_9 = arith.constant 1.000000e+00 : f32
    %18 = vector.broadcast %cst_9 : f32 to vector<1x128xf32>
    %19 = arith.subf %18, %13 : vector<1x128xf32>
    %cst_10 = arith.constant 9.99999995E+11 : f32
    %20 = vector.broadcast %cst_10 : f32 to vector<1x128xf32>
    %21 = arith.mulf %19, %20 : vector<1x128xf32>
    %22 = arith.cmpi sgt, %16, %17 : vector<128x128xi32>
    %cst_11 = arith.constant 9.99999995E+11 : f32
    %cst_12 = arith.constant 0.000000e+00 : f32
    %23 = vector.broadcast %cst_11 : f32 to vector<128x128xf32>
    %24 = vector.broadcast %cst_12 : f32 to vector<128x128xf32>
    %25 = arith.select %22, %23, %24 : vector<128x128xi1>, vector<128x128xf32>
    %26 = vector.broadcast %21 : vector<1x128xf32> to vector<128x128xf32>
    %27 = arith.addf %26, %25 : vector<128x128xf32>
    %28 = vector.extract_strided_slice %9 {offsets = [0, 0], sizes = [1, 128], strides = [1, 1]} : vector<4x128xf32> to vector<1x128xf32>
    %29 = vector.broadcast %28 : vector<1x128xf32> to vector<128x128xf32>
    %30 = arith.addf %8, %29 : vector<128x128xf32>
    %31 = vector.extract_strided_slice %11 {offsets = [0, 0], sizes = [128, 1], strides = [1, 1]} : vector<128x4xf32> to vector<128x1xf32>
    %32 = vector.broadcast %31 : vector<128x1xf32> to vector<128x128xf32>
    %33 = arith.addf %30, %32 : vector<128x128xf32>
    %34 = vector.broadcast %13 : vector<1x128xf32> to vector<128x128xf32>
    %35 = arith.mulf %33, %34 : vector<128x128xf32>
    %36 = arith.subf %35, %27 : vector<128x128xf32>
    %c0_13 = arith.constant 0 : index
    %c0_14 = arith.constant 0 : index
    %c0_15 = arith.constant 0 : index
    %c0_16 = arith.constant 0 : index
    %37 = vector.load %arg12[%c0_13, %c0_14, %c0_15, %c0_16] : memref<1x4x128x128xf32, #tpu.memory_space<vmem>>, vector<1x1x128x128xf32>
    %38 = vector.shape_cast %37 : vector<1x1x128x128xf32> to vector<128x128xf32>
    %39 = vector.shape_cast %36 : vector<128x128xf32> to vector<1x1x128x128xf32>
    tpu.vector_store %arg12[%c0_13, %c0_14, %c0_15, %c0_16], %39 {strides = array<i32>} : memref<1x4x128x128xf32, #tpu.memory_space<vmem>>, vector<1x1x128x128xf32>,
    %40 = vector.extract_strided_slice %9 {offsets = [1, 0], sizes = [1, 128], strides = [1, 1]} : vector<4x128xf32> to vector<1x128xf32>
    %41 = vector.broadcast %40 : vector<1x128xf32> to vector<128x128xf32>
    %42 = arith.addf %8, %41 : vector<128x128xf32>
    %43 = vector.extract_strided_slice %11 {offsets = [0, 1], sizes = [128, 1], strides = [1, 1]} : vector<128x4xf32> to vector<128x1xf32>
    %44 = vector.broadcast %43 : vector<128x1xf32> to vector<128x128xf32>
    %45 = arith.addf %42, %44 : vector<128x128xf32>
    %46 = vector.broadcast %13 : vector<1x128xf32> to vector<128x128xf32>
    %47 = arith.mulf %45, %46 : vector<128x128xf32>
    %48 = arith.subf %47, %27 : vector<128x128xf32>
    %c0_17 = arith.constant 0 : index
    %c1 = arith.constant 1 : index
    %c0_18 = arith.constant 0 : index
    %c0_19 = arith.constant 0 : index
    %49 = vector.load %arg12[%c0_17, %c1, %c0_18, %c0_19] : memref<1x4x128x128xf32, #tpu.memory_space<vmem>>, vector<1x1x128x128xf32>
    %50 = vector.shape_cast %49 : vector<1x1x128x128xf32> to vector<128x128xf32>
    %51 = vector.shape_cast %48 : vector<128x128xf32> to vector<1x1x128x128xf32>
    tpu.vector_store %arg12[%c0_17, %c1, %c0_18, %c0_19], %51 {strides = array<i32>} : memref<1x4x128x128xf32, #tpu.memory_space<vmem>>, vector<1x1x128x128xf32>,
    %52 = vector.extract_strided_slice %9 {offsets = [2, 0], sizes = [1, 128], strides = [1, 1]} : vector<4x128xf32> to vector<1x128xf32>
    %53 = vector.broadcast %52 : vector<1x128xf32> to vector<128x128xf32>
    %54 = arith.addf %8, %53 : vector<128x128xf32>
    %55 = vector.extract_strided_slice %11 {offsets = [0, 2], sizes = [128, 1], strides = [1, 1]} : vector<128x4xf32> to vector<128x1xf32>
    %56 = vector.broadcast %55 : vector<128x1xf32> to vector<128x128xf32>
    %57 = arith.addf %54, %56 : vector<128x128xf32>
    %58 = vector.broadcast %13 : vector<1x128xf32> to vector<128x128xf32>
    %59 = arith.mulf %57, %58 : vector<128x128xf32>
    %60 = arith.subf %59, %27 : vector<128x128xf32>
    %c0_20 = arith.constant 0 : index
    %c2 = arith.constant 2 : index
    %c0_21 = arith.constant 0 : index
    %c0_22 = arith.constant 0 : index
    %61 = vector.load %arg12[%c0_20, %c2, %c0_21, %c0_22] : memref<1x4x128x128xf32, #tpu.memory_space<vmem>>, vector<1x1x128x128xf32>
    %62 = vector.shape_cast %61 : vector<1x1x128x128xf32> to vector<128x128xf32>
    %63 = vector.shape_cast %60 : vector<128x128xf32> to vector<1x1x128x128xf32>
    tpu.vector_store %arg12[%c0_20, %c2, %c0_21, %c0_22], %63 {strides = array<i32>} : memref<1x4x128x128xf32, #tpu.memory_space<vmem>>, vector<1x1x128x128xf32>,
    %64 = vector.extract_strided_slice %9 {offsets = [3, 0], sizes = [1, 128], strides = [1, 1]} : vector<4x128xf32> to vector<1x128xf32>
    %65 = vector.broadcast %64 : vector<1x128xf32> to vector<128x128xf32>
    %66 = arith.addf %8, %65 : vector<128x128xf32>
    %67 = vector.extract_strided_slice %11 {offsets = [0, 3], sizes = [128, 1], strides = [1, 1]} : vector<128x4xf32> to vector<128x1xf32>
    %68 = vector.broadcast %67 : vector<128x1xf32> to vector<128x128xf32>
    %69 = arith.addf %66, %68 : vector<128x128xf32>
    %70 = vector.broadcast %13 : vector<1x128xf32> to vector<128x128xf32>
    %71 = arith.mulf %69, %70 : vector<128x128xf32>
    %72 = arith.subf %71, %27 : vector<128x128xf32>
    %c0_23 = arith.constant 0 : index
    %c3 = arith.constant 3 : index
    %c0_24 = arith.constant 0 : index
    %c0_25 = arith.constant 0 : index
    %73 = vector.load %arg12[%c0_23, %c3, %c0_24, %c0_25] : memref<1x4x128x128xf32, #tpu.memory_space<vmem>>, vector<1x1x128x128xf32>
    %74 = vector.shape_cast %73 : vector<1x1x128x128xf32> to vector<128x128xf32>
    %75 = vector.shape_cast %72 : vector<128x128xf32> to vector<1x1x128x128xf32>
    tpu.vector_store %arg12[%c0_23, %c3, %c0_24, %c0_25], %75 {strides = array<i32>} : memref<1x4x128x128xf32, #tpu.memory_space<vmem>>, vector<1x1x128x128xf32>,
    return
  }
  func.func @transform_0(%arg0: i32, %arg1: i32) -> (i32, i32, i32) {
    %c0_i32 = arith.constant 0 : i32
    %c0_i32_0 = arith.constant 0 : i32
    %c0_i32_1 = arith.constant 0 : i32
    return %arg0, %c0_i32, %c0_i32_0 : i32, i32, i32
  }
  func.func @transform_1(%arg0: i32, %arg1: i32) -> (i32, i32) {
    %c0_i32 = arith.constant 0 : i32
    %c0_i32_0 = arith.constant 0 : i32
    %c0_i32_1 = arith.constant 0 : i32
    return %c0_i32, %c0_i32_0 : i32, i32
  }
  func.func @transform_2(%arg0: i32, %arg1: i32) -> (i32, i32) {
    %c0_i32 = arith.constant 0 : i32
    %c0_i32_0 = arith.constant 0 : i32
    %c0_i32_1 = arith.constant 0 : i32
    return %c0_i32, %c0_i32_0 : i32, i32
  }
  func.func @transform_3(%arg0: i32, %arg1: i32) -> (i32, i32) {
    %c0_i32 = arith.constant 0 : i32
    %c0_i32_0 = arith.constant 0 : i32
    %c0_i32_1 = arith.constant 0 : i32
    return %c0_i32, %c0_i32_0 : i32, i32
  }
  func.func @transform_4(%arg0: i32, %arg1: i32) -> (i32, i32) {
    %c0_i32 = arith.constant 0 : i32
    %c0_i32_0 = arith.constant 0 : i32
    %c0_i32_1 = arith.constant 0 : i32
    return %c0_i32, %c0_i32_0 : i32, i32
  }
  func.func @transform_5(%arg0: i32, %arg1: i32) -> (i32, i32) {
    %c0_i32 = arith.constant 0 : i32
    %c0_i32_0 = arith.constant 0 : i32
    %c0_i32_1 = arith.constant 0 : i32
    return %c0_i32, %c0_i32_0 : i32, i32
  }
  func.func @transform_6(%arg0: i32, %arg1: i32) -> (i32, i32) {
    %c0_i32 = arith.constant 0 : i32
    %c0_i32_0 = arith.constant 0 : i32
    %c0_i32_1 = arith.constant 0 : i32
    return %c0_i32, %c0_i32_0 : i32, i32
  }
  func.func @transform_7(%arg0: i32, %arg1: i32) -> (i32, i32) {
    %c0_i32 = arith.constant 0 : i32
    %c0_i32_0 = arith.constant 0 : i32
    %c0_i32_1 = arith.constant 0 : i32
    return %c0_i32, %c0_i32_0 : i32, i32
  }
  func.func @transform_8(%arg0: i32, %arg1: i32) -> (i32, i32) {
    %c0_i32 = arith.constant 0 : i32
    %c0_i32_0 = arith.constant 0 : i32
    %c0_i32_1 = arith.constant 0 : i32
    return %c0_i32, %c0_i32_0 : i32, i32
  }
  func.func @transform_9(%arg0: i32, %arg1: i32) -> (i32, i32, i32) {
    %c0_i32 = arith.constant 0 : i32
    %c0_i32_0 = arith.constant 0 : i32
    %c0_i32_1 = arith.constant 0 : i32
    return %arg0, %c0_i32, %c0_i32_0 : i32, i32, i32
  }
  func.func @transform_10(%arg0: i32, %arg1: i32) -> (i32, i32, i32, i32) {
    %c0_i32 = arith.constant 0 : i32
    %c0_i32_0 = arith.constant 0 : i32
    %c0_i32_1 = arith.constant 0 : i32
    return %arg0, %c0_i32, %arg1, %c0_i32_0 : i32, i32, i32, i32
  }
}

</mosaic_0001>

<llo_original>
// kernel: tpu_custom_call.1
$region0: #{tpu_custom_call.1}
  #allocation0 [shape = 'u32[]', space=smem, size = 0x4, offset = 0x4, fixed_abs, tag = 'smem constant byte address 0x4 - core index']
  #allocation1 [shape = 'u32[72,128]{1,0:T(1,128)}', space=vmem, size = 0x9000, scoped, tag = 'internal scratch']
  #allocation2 [shape = 'bf16[128,16]{1,0:T(8,128)(2,1)}', space=vmem, size = 0x8000, scoped, tag = 'scratch operand']
  #allocation3 [shape = 'bf16[128,16]{1,0:T(8,128)(2,1)}', space=vmem, size = 0x8000, scoped, tag = 'scratch operand']
  #allocation4 [shape = 'f32[4,128]{1,0:T(4,128)}', space=vmem, size = 0x800, scoped, tag = 'scratch operand']
  #allocation5 [shape = 'f32[128,4]{1,0:T(8,128)}', space=vmem, size = 0x10000, scoped, tag = 'scratch operand']
  %s0 = inlined_call_operand.vmem [shape: bf16[2,128,32], index: 0, kind: input, shape index: {}]
  %s1 = inlined_call_operand.vmem [shape: bf16[32,32], index: 1, kind: input, shape index: {}]
  %s2 = inlined_call_operand.vmem [shape: f32[1,32], index: 2, kind: input, shape index: {}]
  %s3 = inlined_call_operand.vmem [shape: bf16[4,32], index: 3, kind: input, shape index: {}]
  %s4 = inlined_call_operand.vmem [shape: bf16[32,4], index: 4, kind: input, shape index: {}]
  %s5 = inlined_call_operand.vmem [shape: f32[4,1], index: 5, kind: input, shape index: {}]
  %s6 = inlined_call_operand.vmem [shape: f32[1,4], index: 6, kind: input, shape index: {}]
  %s7 = inlined_call_operand.vmem [shape: f32[128,16], index: 7, kind: input, shape index: {}]
  %s8 = inlined_call_operand.vmem [shape: f32[128,16], index: 8, kind: input, shape index: {}]
  %s9 = inlined_call_operand.vmem [shape: f32[2,1,128], index: 9, kind: input, shape index: {}]
  %s10 = inlined_call_operand.hbm [shape: f32[2,4,128,128], index: 10, kind: output, shape index: {}]
  %s11 = sld [smem:[#allocation0]]
  $region77: #{tpu_custom_call.1} parent=0
    _
  %s13 = ssub.s32 1, %s11
  %s14 = scalar_select 0, %s13, %s11
  $region1: #{tpu_custom_call.1} parent=0
    #allocation6 [shape = 'u8[524288]{0}', space=vmem, size = 0x80000, scoped, tag = 'output window, operand 0']
    #allocation7 [shape = 's32[2]{0}', space=sflag, size = 0x8, scoped, tag = 'scoped memory for tpu_custom_call.1']
    %15 = vsyncpa [#allocation7], 0
    %s16 = scalar_lea.sflag [#allocation7], 1
    %17 = vsyncpa %s16, 0
    loop: start=0, step=1, limit=4
    $region2: #{tpu_custom_call.1} parent=1 // loop_pre_header
      _
    $region3: #{tpu_custom_call.1} parent=1 // loop_header
      %s19 = sphi 0, %s23
      %p20 = scmp.ge.s32.totalorder %s19, 4
      %s26 = sphi 0, %s38
      %s27 = sphi 0, %s34
      %s28 = sphi 0, %s26
      %s29 = sphi 0, %s27
      %s30 = sphi 0, %s28
      %s31 = sphi 0, %s29
      %s41 = sphi 0, %s43
      %s44 = sphi 0, %s41
      %s45 = sphi 0, %s44
      %s61 = sphi 0, %s45
      %s65 = sphi 0, %s65
      %s67 = sphi 0, %s65
      %s68 = sphi 0, %s67
      %s82 = sphi 0, %s68
      %s86 = sphi 0, %s86
      %s88 = sphi 0, %s86
      %s89 = sphi 0, %s88
      %s103 = sphi 0, %s89
      %s107 = sphi 0, %s107
      %s109 = sphi 0, %s107
      %s110 = sphi 0, %s109
      %s124 = sphi 0, %s110
      %s128 = sphi 0, %s128
      %s130 = sphi 0, %s128
      %s131 = sphi 0, %s130
      %s145 = sphi 0, %s131
      %s149 = sphi 0, %s149
      %s151 = sphi 0, %s149
      %s152 = sphi 0, %s151
      %s166 = sphi 0, %s152
      %s170 = sphi 0, %s170
      %s172 = sphi 0, %s170
      %s173 = sphi 0, %s172
      %s187 = sphi 0, %s173
      %s191 = sphi 0, %s191
      %s193 = sphi 0, %s191
      %s194 = sphi 0, %s193
      %s208 = sphi 0, %s194
      %s212 = sphi 0, %s212
      %s214 = sphi 0, %s212
      %s215 = sphi 0, %s214
      %s229 = sphi 0, %s215
      %s235 = sphi 0, %s237
      %s238 = sphi 0, %s235
      %s239 = sphi 0, %s238
      %s255 = sphi 0, %s239
      %s263 = sphi 0, %s265
      %s266 = sphi 0, %s263
      %s267 = sphi 0, %s266
      %s283 = sphi 0, %s267
    $region4: #{tpu_custom_call.1} parent=1 // loop_header_branch
      %22 = sbr.rel (%p20) target = $region8
    $region5: #{tpu_custom_call.1} parent=1 // loop_body
      %s24 = ssub.s32 %s19, 1
      %s25 = ssub.s32 %s19, 2
      %s32 = sadd.s32 1, %s27
      %p33 = scmp.ge.s32.totalorder %s32, 1
      %s34 = scalar_select %p33, 0, %s32
      %s35 = sadd.s32 1, %s26
      %s36 = scalar_select %p33, %s35, %s26
      %p37 = scmp.ge.s32.totalorder %s36, 2
      %s38 = scalar_select %p37, 0, %s36
      %s39 = ssub.s32 %s26, %s38
      %p40 = scmp.eq.s32.totalorder %s39, 0
      %s42 = sadd.s32 %s41, 1
      %s43 = scalar_select %p40, %s41, %s42
      %p46 = pneg %p40
      %p47 = scmp.eq.s32.totalorder %s19, 1
      %p48 = por %p46, %p47
      %p49 = scmp.ne.s32.totalorder %s41, %s44
      %p50 = scmp.eq.s32.totalorder %s19, 0
      %p51 = por %p49, %p50
      %p52 = scmp.ne.s32.totalorder %s41, %s44
      %p53 = scmp.eq.s32.totalorder %s24, 1
      %p54 = por %p52, %p53
      %p55 = scmp.ne.s32.totalorder %s44, %s45
      %p56 = scmp.eq.s32.totalorder %s24, 0
      %p57 = por %p55, %p56
      %p58 = scmp.ne.s32.totalorder %s44, %s45
      %p59 = scmp.eq.s32.totalorder %s25, 1
      %p60 = por %p58, %p59
      %p62 = scmp.ne.s32.totalorder %s45, %s61
      %p63 = scmp.eq.s32.totalorder %s25, 0
      %p64 = por %p62, %p63
      %s66 = sadd.s32 %s65, 1
      %p69 = scmp.eq.s32.totalorder %s19, 1
      %p70 = scmp.ne.s32.totalorder %s65, %s67
      %p71 = scmp.eq.s32.totalorder %s19, 0
      %p72 = por %p70, %p71
      %p73 = scmp.ne.s32.totalorder %s65, %s67
      %p74 = scmp.eq.s32.totalorder %s24, 1
      %p75 = por %p73, %p74
      %p76 = scmp.ne.s32.totalorder %s67, %s68
      %p77 = scmp.eq.s32.totalorder %s24, 0
      %p78 = por %p76, %p77
      %p79 = scmp.ne.s32.totalorder %s67, %s68
      %p80 = scmp.eq.s32.totalorder %s25, 1
      %p81 = por %p79, %p80
      %p83 = scmp.ne.s32.totalorder %s68, %s82
      %p84 = scmp.eq.s32.totalorder %s25, 0
      %p85 = por %p83, %p84
      %s87 = sadd.s32 %s86, 1
      %p90 = scmp.eq.s32.totalorder %s19, 1
      %p91 = scmp.ne.s32.totalorder %s86, %s88
      %p92 = scmp.eq.s32.totalorder %s19, 0
      %p93 = por %p91, %p92
      %p94 = scmp.ne.s32.totalorder %s86, %s88
      %p95 = scmp.eq.s32.totalorder %s24, 1
      %p96 = por %p94, %p95
      %p97 = scmp.ne.s32.totalorder %s88, %s89
      %p98 = scmp.eq.s32.totalorder %s24, 0
      %p99 = por %p97, %p98
      %p100 = scmp.ne.s32.totalorder %s88, %s89
      %p101 = scmp.eq.s32.totalorder %s25, 1
      %p102 = por %p100, %p101
      %p104 = scmp.ne.s32.totalorder %s89, %s103
      %p105 = scmp.eq.s32.totalorder %s25, 0
      %p106 = por %p104, %p105
      %s108 = sadd.s32 %s107, 1
      %p111 = scmp.eq.s32.totalorder %s19, 1
      %p112 = scmp.ne.s32.totalorder %s107, %s109
      %p113 = scmp.eq.s32.totalorder %s19, 0
      %p114 = por %p112, %p113
      %p115 = scmp.ne.s32.totalorder %s107, %s109
      %p116 = scmp.eq.s32.totalorder %s24, 1
      %p117 = por %p115, %p116
      %p118 = scmp.ne.s32.totalorder %s109, %s110
      %p119 = scmp.eq.s32.totalorder %s24, 0
      %p120 = por %p118, %p119
      %p121 = scmp.ne.s32.totalorder %s109, %s110
      %p122 = scmp.eq.s32.totalorder %s25, 1
      %p123 = por %p121, %p122
      %p125 = scmp.ne.s32.totalorder %s110, %s124
      %p126 = scmp.eq.s32.totalorder %s25, 0
      %p127 = por %p125, %p126
      %s129 = sadd.s32 %s128, 1
      %p132 = scmp.eq.s32.totalorder %s19, 1
      %p133 = scmp.ne.s32.totalorder %s128, %s130
      %p134 = scmp.eq.s32.totalorder %s19, 0
      %p135 = por %p133, %p134
      %p136 = scmp.ne.s32.totalorder %s128, %s130
      %p137 = scmp.eq.s32.totalorder %s24, 1
      %p138 = por %p136, %p137
      %p139 = scmp.ne.s32.totalorder %s130, %s131
      %p140 = scmp.eq.s32.totalorder %s24, 0
      %p141 = por %p139, %p140
      %p142 = scmp.ne.s32.totalorder %s130, %s131
      %p143 = scmp.eq.s32.totalorder %s25, 1
      %p144 = por %p142, %p143
      %p146 = scmp.ne.s32.totalorder %s131, %s145
      %p147 = scmp.eq.s32.totalorder %s25, 0
      %p148 = por %p146, %p147
      %s150 = sadd.s32 %s149, 1
      %p153 = scmp.eq.s32.totalorder %s19, 1
      %p154 = scmp.ne.s32.totalorder %s149, %s151
      %p155 = scmp.eq.s32.totalorder %s19, 0
      %p156 = por %p154, %p155
      %p157 = scmp.ne.s32.totalorder %s149, %s151
      %p158 = scmp.eq.s32.totalorder %s24, 1
      %p159 = por %p157, %p158
      %p160 = scmp.ne.s32.totalorder %s151, %s152
      %p161 = scmp.eq.s32.totalorder %s24, 0
      %p162 = por %p160, %p161
      %p163 = scmp.ne.s32.totalorder %s151, %s152
      %p164 = scmp.eq.s32.totalorder %s25, 1
      %p165 = por %p163, %p164
      %p167 = scmp.ne.s32.totalorder %s152, %s166
      %p168 = scmp.eq.s32.totalorder %s25, 0
      %p169 = por %p167, %p168
      %s171 = sadd.s32 %s170, 1
      %p174 = scmp.eq.s32.totalorder %s19, 1
      %p175 = scmp.ne.s32.totalorder %s170, %s172
      %p176 = scmp.eq.s32.totalorder %s19, 0
      %p177 = por %p175, %p176
      %p178 = scmp.ne.s32.totalorder %s170, %s172
      %p179 = scmp.eq.s32.totalorder %s24, 1
      %p180 = por %p178, %p179
      %p181 = scmp.ne.s32.totalorder %s172, %s173
      %p182 = scmp.eq.s32.totalorder %s24, 0
      %p183 = por %p181, %p182
      %p184 = scmp.ne.s32.totalorder %s172, %s173
      %p185 = scmp.eq.s32.totalorder %s25, 1
      %p186 = por %p184, %p185
      %p188 = scmp.ne.s32.totalorder %s173, %s187
      %p189 = scmp.eq.s32.totalorder %s25, 0
      %p190 = por %p188, %p189
      %s192 = sadd.s32 %s191, 1
      %p195 = scmp.eq.s32.totalorder %s19, 1
      %p196 = scmp.ne.s32.totalorder %s191, %s193
      %p197 = scmp.eq.s32.totalorder %s19, 0
      %p198 = por %p196, %p197
      %p199 = scmp.ne.s32.totalorder %s191, %s193
      %p200 = scmp.eq.s32.totalorder %s24, 1
      %p201 = por %p199, %p200
      %p202 = scmp.ne.s32.totalorder %s193, %s194
      %p203 = scmp.eq.s32.totalorder %s24, 0
      %p204 = por %p202, %p203
      %p205 = scmp.ne.s32.totalorder %s193, %s194
      %p206 = scmp.eq.s32.totalorder %s25, 1
      %p207 = por %p205, %p206
      %p209 = scmp.ne.s32.totalorder %s194, %s208
      %p210 = scmp.eq.s32.totalorder %s25, 0
      %p211 = por %p209, %p210
      %s213 = sadd.s32 %s212, 1
      %p216 = scmp.eq.s32.totalorder %s19, 1
      %p217 = scmp.ne.s32.totalorder %s212, %s214
      %p218 = scmp.eq.s32.totalorder %s19, 0
      %p219 = por %p217, %p218
      %p220 = scmp.ne.s32.totalorder %s212, %s214
      %p221 = scmp.eq.s32.totalorder %s24, 1
      %p222 = por %p220, %p221
      %p223 = scmp.ne.s32.totalorder %s214, %s215
      %p224 = scmp.eq.s32.totalorder %s24, 0
      %p225 = por %p223, %p224
      %p226 = scmp.ne.s32.totalorder %s214, %s215
      %p227 = scmp.eq.s32.totalorder %s25, 1
      %p228 = por %p226, %p227
      %p230 = scmp.ne.s32.totalorder %s215, %s229
      %p231 = scmp.eq.s32.totalorder %s25, 0
      %p232 = por %p230, %p231
      %s233 = ssub.s32 %s26, %s38
      %p234 = scmp.eq.s32.totalorder %s233, 0
      %s236 = sadd.s32 %s235, 1
      %s237 = scalar_select %p234, %s235, %s236
      %p240 = pneg %p234
      %p241 = scmp.eq.s32.totalorder %s19, 1
      %p242 = por %p240, %p241
      %p243 = scmp.ne.s32.totalorder %s235, %s238
      %p244 = scmp.eq.s32.totalorder %s19, 0
      %p245 = por %p243, %p244
      %p246 = scmp.ne.s32.totalorder %s235, %s238
      %p247 = scmp.eq.s32.totalorder %s24, 1
      %p248 = por %p246, %p247
      %p249 = scmp.ne.s32.totalorder %s238, %s239
      %p250 = scmp.eq.s32.totalorder %s24, 0
      %p251 = por %p249, %p250
      %p252 = scmp.ne.s32.totalorder %s238, %s239
      %p253 = scmp.eq.s32.totalorder %s25, 1
      %p254 = por %p252, %p253
      %p256 = scmp.ne.s32.totalorder %s239, %s255
      %p257 = scmp.eq.s32.totalorder %s25, 0
      %p258 = por %p256, %p257
      %s259 = ssub.s32 %s26, %s38
      %s260 = ssub.s32 %s27, %s34
      %s261 = sor.u32 %s259, %s260
      %p262 = scmp.eq.s32.totalorder %s261, 0
      %s264 = sadd.s32 %s263, 1
      %s265 = scalar_select %p262, %s263, %s264
      %p268 = pneg %p262
      %p269 = scmp.eq.s32.totalorder %s19, 1
      %p270 = por %p268, %p269
      %p271 = scmp.ne.s32.totalorder %s263, %s266
      %p272 = scmp.eq.s32.totalorder %s19, 0
      %p273 = por %p271, %p272
      %p274 = scmp.ne.s32.totalorder %s263, %s266
      %p275 = scmp.eq.s32.totalorder %s24, 1
      %p276 = por %p274, %p275
      %p277 = scmp.ne.s32.totalorder %s266, %s267
      %p278 = scmp.eq.s32.totalorder %s24, 0
      %p279 = por %p277, %p278
      %p280 = scmp.ne.s32.totalorder %s266, %s267
      %p281 = scmp.eq.s32.totalorder %s25, 1
      %p282 = por %p280, %p281
      %p284 = scmp.ne.s32.totalorder %s267, %s283
      %p285 = scmp.eq.s32.totalorder %s25, 0
      %p286 = por %p284, %p285
      %p287 = scmp.le.s32.totalorder 1, %s19
      %p288 = scmp.lt.s32.totalorder %s19, 3
      %p289 = pnand %p287, %p288
      %p290 = pneg %p289
      // Predicated region
      $region9: #{tpu_custom_call.1} parent=5 // pred_check
        _
      $region10: #{tpu_custom_call.1} parent=5 // pred_check_branch
        %292 = sbr.rel (%p289) target = $region12
      $region11: #{tpu_custom_call.1} parent=5 // pred_region
        %s293 = ssub.s32 %s19, 1
        // Predicated region
        $region13: #{tpu_custom_call.1} parent=11 // pred_check
          %p294 = pneg %p78
        $region14: #{tpu_custom_call.1} parent=11 // pred_check_branch
          %296 = sbr.rel (%p294) target = $region16
        $region15: #{tpu_custom_call.1} parent=11 // pred_region
          _
        $region16: #{tpu_custom_call.1} parent=11 // pred_fallthru
          _
        // Predicated region
        $region17: #{tpu_custom_call.1} parent=11 // pred_check
          %p297 = pneg %p99
        $region18: #{tpu_custom_call.1} parent=11 // pred_check_branch
          %299 = sbr.rel (%p297) target = $region20
        $region19: #{tpu_custom_call.1} parent=11 // pred_region
          _
        $region20: #{tpu_custom_call.1} parent=11 // pred_fallthru
          _
        // Predicated region
        $region21: #{tpu_custom_call.1} parent=11 // pred_check
          %p300 = pneg %p120
        $region22: #{tpu_custom_call.1} parent=11 // pred_check_branch
          %302 = sbr.rel (%p300) target = $region24
        $region23: #{tpu_custom_call.1} parent=11 // pred_region
          _
        $region24: #{tpu_custom_call.1} parent=11 // pred_fallthru
          _
        // Predicated region
        $region25: #{tpu_custom_call.1} parent=11 // pred_check
          %p303 = pneg %p141
        $region26: #{tpu_custom_call.1} parent=11 // pred_check_branch
          %305 = sbr.rel (%p303) target = $region28
        $region27: #{tpu_custom_call.1} parent=11 // pred_region
          _
        $region28: #{tpu_custom_call.1} parent=11 // pred_fallthru
          _
        // Predicated region
        $region29: #{tpu_custom_call.1} parent=11 // pred_check
          %p306 = pneg %p162
        $region30: #{tpu_custom_call.1} parent=11 // pred_check_branch
          %308 = sbr.rel (%p306) target = $region32
        $region31: #{tpu_custom_call.1} parent=11 // pred_region
          _
        $region32: #{tpu_custom_call.1} parent=11 // pred_fallthru
          _
        // Predicated region
        $region33: #{tpu_custom_call.1} parent=11 // pred_check
          %p309 = pneg %p183
        $region34: #{tpu_custom_call.1} parent=11 // pred_check_branch
          %311 = sbr.rel (%p309) target = $region36
        $region35: #{tpu_custom_call.1} parent=11 // pred_region
          _
        $region36: #{tpu_custom_call.1} parent=11 // pred_fallthru
          _
        // Predicated region
        $region37: #{tpu_custom_call.1} parent=11 // pred_check
          %p312 = pneg %p204
        $region38: #{tpu_custom_call.1} parent=11 // pred_check_branch
          %314 = sbr.rel (%p312) target = $region40
        $region39: #{tpu_custom_call.1} parent=11 // pred_region
          _
        $region40: #{tpu_custom_call.1} parent=11 // pred_fallthru
          _
        // Predicated region
        $region41: #{tpu_custom_call.1} parent=11 // pred_check
          %p315 = pneg %p225
        $region42: #{tpu_custom_call.1} parent=11 // pred_check_branch
          %317 = sbr.rel (%p315) target = $region44
        $region43: #{tpu_custom_call.1} parent=11 // pred_region
          _
        $region44: #{tpu_custom_call.1} parent=11 // pred_fallthru
          _
      $region12: #{tpu_custom_call.1} parent=5 // pred_fallthru
        _
      %p318 = scmp.lt.s32.totalorder %s19, 2
      // Predicated region
      $region45: #{tpu_custom_call.1} parent=5 // pred_check
        %p319 = pneg %p318
      $region46: #{tpu_custom_call.1} parent=5 // pred_check_branch
        %321 = sbr.rel (%p319) target = $region48
      $region47: #{tpu_custom_call.1} parent=5 // pred_region
        // Predicated region
        $region49: #{tpu_custom_call.1} parent=47 // pred_check
          %p322 = pneg %p51
        $region50: #{tpu_custom_call.1} parent=47 // pred_check_branch
          %324 = sbr.rel (%p322) target = $region52
        $region51: #{tpu_custom_call.1} parent=47 // pred_region
          %p325 = scmp.lt.s32.totalorder %s26, 1
          %s326 = scalar_select %p325, %s26, 1
          %s327 = smul.addr %s326, 16
          %s328 = smul.addr %s327, 4
          %s329 = scalar_lea.vmem %s0, %s328
        $region52: #{tpu_custom_call.1} parent=47 // pred_fallthru
          _
        // Predicated region
        $region53: #{tpu_custom_call.1} parent=47 // pred_check
          %p330 = pneg %p245
        $region54: #{tpu_custom_call.1} parent=47 // pred_check_branch
          %332 = sbr.rel (%p330) target = $region56
        $region55: #{tpu_custom_call.1} parent=47 // pred_region
          %p333 = scmp.lt.s32.totalorder %s26, 1
          %s334 = scalar_select %p333, %s26, 1
          %s335 = scalar_lea.vmem %s9, %s334
        $region56: #{tpu_custom_call.1} parent=47 // pred_fallthru
          _
      $region48: #{tpu_custom_call.1} parent=5 // pred_fallthru
        _
      %p336 = scmp.le.s32.totalorder 1, %s19
      %p337 = scmp.lt.s32.totalorder %s19, 3
      %p338 = pnand %p336, %p337
      %p339 = pneg %p338
      // Predicated region
      $region57: #{tpu_custom_call.1} parent=5 // pred_check
        _
      $region58: #{tpu_custom_call.1} parent=5 // pred_check_branch
        %341 = sbr.rel (%p338) target = $region60
      $region59: #{tpu_custom_call.1} parent=5 // pred_region
        %s342 = ssub.s32 %s19, 1
        %p343 = scmp.lt.s32.totalorder %s28, 1
        %s344 = scalar_select %p343, %s28, 1
        %s345 = smul.addr %s344, 16
        %s346 = smul.addr %s345, 4
        %s347 = scalar_lea.vmem %s0, %s346
        %p348 = pneg %p57
        %p349 = pneg %p54
        %p350 = pneg %p78
        %p351 = pneg %p75
        %p352 = pneg %p99
        %p353 = pneg %p96
        %p354 = pneg %p120
        %p355 = pneg %p117
        %p356 = pneg %p141
        %p357 = pneg %p138
        %p358 = pneg %p162
        %p359 = pneg %p159
        %p360 = pneg %p183
        %p361 = pneg %p180
        %p362 = pneg %p204
        %p363 = pneg %p201
        %p364 = pneg %p225
        %p365 = pneg %p222
        %p366 = scmp.lt.s32.totalorder %s28, 1
        %s367 = scalar_select %p366, %s28, 1
        %s368 = scalar_lea.vmem %s9, %s367
        %p369 = pneg %p251
        %p370 = pneg %p248
        %p371 = pneg %p279
        %p372 = pneg %p276
        %s373 = sand.u32 %s266, 1
        %s374 = scalar_lea.sflag [#allocation7], %s373
        %s375 = sand.u32 %s266, 1
        %s376 = smul.addr %s375, 512
        %s377 = scalar_lea.vmem [#allocation6], %s376
        %p378 = scmp.lt.s32.totalorder %s28, 1
        %s379 = scalar_select %p378, %s28, 1
        %s380 = smul.addr %s379, 16
        %s381 = smul.addr %s380, 4
        %s382 = scalar_lea.vmem %s0, %s381
        %p383 = scmp.lt.s32.totalorder %s28, 1
        %s384 = scalar_select %p383, %s28, 1
        %s385 = scalar_lea.vmem %s9, %s384
        %s386 = smul.u32 16, %s29
        %p388 = scmp.eq.s32.totalorder %s29, 0
        // Predicated region
        $region61: #{tpu_custom_call.1} parent=59 // pred_check
          %p389 = pneg %p388
        $region62: #{tpu_custom_call.1} parent=59 // pred_check_branch
          %391 = sbr.rel (%p389) target = $region64
        $region63: #{tpu_custom_call.1} parent=59 // pred_region
          %v392 = vld [vmem:[%s382] sm:$0xf]
          %v393 = vld [vmem:[%s382 + $0x4] sm:$0xf]
          %v394 = vld [vmem:[%s382 + $0x8] sm:$0xf]
          %v395 = vld [vmem:[%s382 + $0xc] sm:$0xf]
          %v396 = vld [vmem:[%s382 + $0x10] sm:$0xf]
          %v397 = vld [vmem:[%s382 + $0x14] sm:$0xf]
          %v398 = vld [vmem:[%s382 + $0x18] sm:$0xf]
          %v399 = vld [vmem:[%s382 + $0x1c] sm:$0xf]
          %v400 = vld [vmem:[%s382 + $0x20] sm:$0xf]
          %v401 = vld [vmem:[%s382 + $0x24] sm:$0xf]
          %v402 = vld [vmem:[%s382 + $0x28] sm:$0xf]
          %v403 = vld [vmem:[%s382 + $0x2c] sm:$0xf]
          %v404 = vld [vmem:[%s382 + $0x30] sm:$0xf]
          %v405 = vld [vmem:[%s382 + $0x34] sm:$0xf]
          %v406 = vld [vmem:[%s382 + $0x38] sm:$0xf]
          %v407 = vld [vmem:[%s382 + $0x3c] sm:$0xf]
          %v408 = vld [vmem:[%s1] sm:$0xf]
          %v409 = vld [vmem:[%s1 + $0x4] sm:$0xf]
          %v410 = vld [vmem:[%s1 + $0x8] sm:$0xf]
          %v411 = vld [vmem:[%s1 + $0xc] sm:$0xf]
          %v412 = vld [vmem:[%s2] sm:$0x1]
          %v414 = vperm.slane %v412, 0
          %v432 = vunpack.c.l.b16 %v392
          %v433 = vunpack.c.l.b16 %v393
          %v434 = vunpack.c.l.b16 %v394
          %v435 = vunpack.c.l.b16 %v395
          %v436 = vunpack.c.l.b16 %v396
          %v437 = vunpack.c.l.b16 %v397
          %v438 = vunpack.c.l.b16 %v398
          %v439 = vunpack.c.l.b16 %v399
          %v440 = vunpack.c.l.b16 %v400
          %v441 = vunpack.c.l.b16 %v401
          %v442 = vunpack.c.l.b16 %v402
          %v443 = vunpack.c.l.b16 %v403
          %v444 = vunpack.c.l.b16 %v404
          %v445 = vunpack.c.l.b16 %v405
          %v446 = vunpack.c.l.b16 %v406
          %v447 = vunpack.c.l.b16 %v407
          %v448 = vpack.c.b16 %v433, %v432
          %v449 = vpack.c.b16 %v435, %v434
          %v450 = vpack.c.b16 %v437, %v436
          %v451 = vpack.c.b16 %v439, %v438
          %v452 = vpack.c.b16 %v441, %v440
          %v453 = vpack.c.b16 %v443, %v442
          %v454 = vpack.c.b16 %v445, %v444
          %v455 = vpack.c.b16 %v447, %v446
          %v460 = vunpack.c.l.b16 %v408
          %v461 = vunpack.c.l.b16 %v409
          %v462 = vunpack.c.l.b16 %v410
          %v463 = vunpack.c.l.b16 %v411
          %v464 = vpack.c.b16 %v461, %v460
          %v465 = vpack.c.b16 %v463, %v462
          %vm468 = vcmask 261120
          %v470 = vsel %vm468, %v448, 0
          %v473 = vsel %vm468, %v449, 0
          %v476 = vsel %vm468, %v450, 0
          %v479 = vsel %vm468, %v451, 0
          %v482 = vsel %vm468, %v452, 0
          %v485 = vsel %vm468, %v453, 0
          %v488 = vsel %vm468, %v454, 0
          %v491 = vsel %vm468, %v455, 0
          %493 = vmatpush.bf16.msra.mxu0 0
          %494 = vmatpush.bf16.msra.mxu0 0
          %495 = vmatpush.bf16.msra.mxu0 0
          %496 = vmatpush.bf16.msra.mxu0 0
          %497 = vmatpush.bf16.msra.mxu0 0
          %498 = vmatpush.bf16.msra.mxu0 0
          %499 = vmatpush.bf16.msra.mxu0 %v465
          %500 = vmatpush.bf16.msra.mxu0 %v464
          %501 = vmatmul.bf16.gmra.mxu0 %v470
          %v502 = vpop.f32.mrf.mxu0
          %v503 = vadd.f32 %v414, %v502
          %v504 = vpop.f32.mrf.mxu0
          %v505 = vadd.f32 %v414, %v504
          %506 = vmatmul.bf16.gmra.mxu0 %v473
          %v507 = vpop.f32.mrf.mxu0
          %v508 = vadd.f32 %v414, %v507
          %v509 = vpop.f32.mrf.mxu0
          %v510 = vadd.f32 %v414, %v509
          %511 = vmatmul.bf16.gmra.mxu0 %v476
          %v512 = vpop.f32.mrf.mxu0
          %v513 = vadd.f32 %v414, %v512
          %v514 = vpop.f32.mrf.mxu0
          %v515 = vadd.f32 %v414, %v514
          %516 = vmatmul.bf16.gmra.mxu0 %v479
          %v517 = vpop.f32.mrf.mxu0
          %v518 = vadd.f32 %v414, %v517
          %v519 = vpop.f32.mrf.mxu0
          %v520 = vadd.f32 %v414, %v519
          %521 = vmatmul.bf16.gmra.mxu0 %v482
          %v522 = vpop.f32.mrf.mxu0
          %v523 = vadd.f32 %v414, %v522
          %v524 = vpop.f32.mrf.mxu0
          %v525 = vadd.f32 %v414, %v524
          %526 = vmatmul.bf16.gmra.mxu0 %v485
          %v527 = vpop.f32.mrf.mxu0
          %v528 = vadd.f32 %v414, %v527
          %v529 = vpop.f32.mrf.mxu0
          %v530 = vadd.f32 %v414, %v529
          %531 = vmatmul.bf16.gmra.mxu0 %v488
          %v532 = vpop.f32.mrf.mxu0
          %v533 = vadd.f32 %v414, %v532
          %v534 = vpop.f32.mrf.mxu0
          %v535 = vadd.f32 %v414, %v534
          %536 = vmatmul.bf16.gmra.mxu0 %v491
          %v537 = vpop.f32.mrf.mxu0
          %v538 = vadd.f32 %v414, %v537
          %v539 = vpop.f32.mrf.mxu0
          %v540 = vadd.f32 %v414, %v539
          %541 = vdwg.mxu0
          %v542 = vld [vmem:[%s7] sm:$0xff]
          %v543 = vld [vmem:[%s7 + $0x8] sm:$0xff]
          %v544 = vld [vmem:[%s7 + $0x10] sm:$0xff]
          %v545 = vld [vmem:[%s7 + $0x18] sm:$0xff]
          %v546 = vld [vmem:[%s7 + $0x20] sm:$0xff]
          %v547 = vld [vmem:[%s7 + $0x28] sm:$0xff]
          %v548 = vld [vmem:[%s7 + $0x30] sm:$0xff]
          %v549 = vld [vmem:[%s7 + $0x38] sm:$0xff]
          %v550 = vld [vmem:[%s7 + $0x40] sm:$0xff]
          %v551 = vld [vmem:[%s7 + $0x48] sm:$0xff]
          %v552 = vld [vmem:[%s7 + $0x50] sm:$0xff]
          %v553 = vld [vmem:[%s7 + $0x58] sm:$0xff]
          %v554 = vld [vmem:[%s7 + $0x60] sm:$0xff]
          %v555 = vld [vmem:[%s7 + $0x68] sm:$0xff]
          %v556 = vld [vmem:[%s7 + $0x70] sm:$0xff]
          %v557 = vld [vmem:[%s7 + $0x78] sm:$0xff]
          %v558 = vld [vmem:[%s8] sm:$0xff]
          %v559 = vld [vmem:[%s8 + $0x8] sm:$0xff]
          %v560 = vld [vmem:[%s8 + $0x10] sm:$0xff]
          %v561 = vld [vmem:[%s8 + $0x18] sm:$0xff]
          %v562 = vld [vmem:[%s8 + $0x20] sm:$0xff]
          %v563 = vld [vmem:[%s8 + $0x28] sm:$0xff]
          %v564 = vld [vmem:[%s8 + $0x30] sm:$0xff]
          %v565 = vld [vmem:[%s8 + $0x38] sm:$0xff]
          %v566 = vld [vmem:[%s8 + $0x40] sm:$0xff]
          %v567 = vld [vmem:[%s8 + $0x48] sm:$0xff]
          %v568 = vld [vmem:[%s8 + $0x50] sm:$0xff]
          %v569 = vld [vmem:[%s8 + $0x58] sm:$0xff]
          %v570 = vld [vmem:[%s8 + $0x60] sm:$0xff]
          %v571 = vld [vmem:[%s8 + $0x68] sm:$0xff]
          %v572 = vld [vmem:[%s8 + $0x70] sm:$0xff]
          %v573 = vld [vmem:[%s8 + $0x78] sm:$0xff]
          %590 = vrot.lane.b32.xlu0 %v503, 120
          %v591 = vpop.permute.xlu0 %590
          %592 = vrot.lane.b32.xlu0 %v505, 120
          %v593 = vpop.permute.xlu0 %592
          %594 = vrot.lane.b32.xlu0 %v508, 120
          %v595 = vpop.permute.xlu0 %594
          %596 = vrot.lane.b32.xlu0 %v510, 120
          %v597 = vpop.permute.xlu0 %596
          %598 = vrot.lane.b32.xlu0 %v513, 120
          %v599 = vpop.permute.xlu0 %598
          %600 = vrot.lane.b32.xlu0 %v515, 120
          %v601 = vpop.permute.xlu0 %600
          %602 = vrot.lane.b32.xlu0 %v518, 120
          %v603 = vpop.permute.xlu0 %602
          %604 = vrot.lane.b32.xlu0 %v520, 120
          %v605 = vpop.permute.xlu0 %604
          %606 = vrot.lane.b32.xlu0 %v523, 120
          %v607 = vpop.permute.xlu0 %606
          %608 = vrot.lane.b32.xlu0 %v525, 120
          %v609 = vpop.permute.xlu0 %608
          %610 = vrot.lane.b32.xlu0 %v528, 120
          %v611 = vpop.permute.xlu0 %610
          %612 = vrot.lane.b32.xlu0 %v530, 120
          %v613 = vpop.permute.xlu0 %612
          %614 = vrot.lane.b32.xlu0 %v533, 120
          %v615 = vpop.permute.xlu0 %614
          %616 = vrot.lane.b32.xlu0 %v535, 120
          %v617 = vpop.permute.xlu0 %616
          %618 = vrot.lane.b32.xlu0 %v538, 120
          %v619 = vpop.permute.xlu0 %618
          %620 = vrot.lane.b32.xlu0 %v540, 120
          %v621 = vpop.permute.xlu0 %620
          %638 = vrot.lane.b32.xlu0 %v503, 8
          %v639 = vpop.permute.xlu0 %638
          %640 = vrot.lane.b32.xlu0 %v505, 8
          %v641 = vpop.permute.xlu0 %640
          %642 = vrot.lane.b32.xlu0 %v508, 8
          %v643 = vpop.permute.xlu0 %642
          %644 = vrot.lane.b32.xlu0 %v510, 8
          %v645 = vpop.permute.xlu0 %644
          %646 = vrot.lane.b32.xlu0 %v513, 8
          %v647 = vpop.permute.xlu0 %646
          %648 = vrot.lane.b32.xlu0 %v515, 8
          %v649 = vpop.permute.xlu0 %648
          %650 = vrot.lane.b32.xlu0 %v518, 8
          %v651 = vpop.permute.xlu0 %650
          %652 = vrot.lane.b32.xlu0 %v520, 8
          %v653 = vpop.permute.xlu0 %652
          %654 = vrot.lane.b32.xlu0 %v523, 8
          %v655 = vpop.permute.xlu0 %654
          %656 = vrot.lane.b32.xlu0 %v525, 8
          %v657 = vpop.permute.xlu0 %656
          %658 = vrot.lane.b32.xlu0 %v528, 8
          %v659 = vpop.permute.xlu0 %658
          %660 = vrot.lane.b32.xlu0 %v530, 8
          %v661 = vpop.permute.xlu0 %660
          %662 = vrot.lane.b32.xlu0 %v533, 8
          %v663 = vpop.permute.xlu0 %662
          %664 = vrot.lane.b32.xlu0 %v535, 8
          %v665 = vpop.permute.xlu0 %664
          %666 = vrot.lane.b32.xlu0 %v538, 8
          %v667 = vpop.permute.xlu0 %666
          %668 = vrot.lane.b32.xlu0 %v540, 8
          %v669 = vpop.permute.xlu0 %668
          %vm686 = vcmask 64512
          %v687 = vsel %vm686, %v591, %v639
          %v688 = vsel %vm686, %v593, %v641
          %v689 = vsel %vm686, %v595, %v643
          %v690 = vsel %vm686, %v597, %v645
          %v691 = vsel %vm686, %v599, %v647
          %v692 = vsel %vm686, %v601, %v649
          %v693 = vsel %vm686, %v603, %v651
          %v694 = vsel %vm686, %v605, %v653
          %v695 = vsel %vm686, %v607, %v655
          %v696 = vsel %vm686, %v609, %v657
          %v697 = vsel %vm686, %v611, %v659
          %v698 = vsel %vm686, %v613, %v661
          %v699 = vsel %vm686, %v615, %v663
          %v700 = vsel %vm686, %v617, %v665
          %v701 = vsel %vm686, %v619, %v667
          %v702 = vsel %vm686, %v621, %v669
          %v703 = vmul.f32 %v503, %v542
          %v704 = vmul.f32 %v505, %v543
          %v705 = vmul.f32 %v508, %v544
          %v706 = vmul.f32 %v510, %v545
          %v707 = vmul.f32 %v513, %v546
          %v708 = vmul.f32 %v515, %v547
          %v709 = vmul.f32 %v518, %v548
          %v710 = vmul.f32 %v520, %v549
          %v711 = vmul.f32 %v523, %v550
          %v712 = vmul.f32 %v525, %v551
          %v713 = vmul.f32 %v528, %v552
          %v714 = vmul.f32 %v530, %v553
          %v715 = vmul.f32 %v533, %v554
          %v716 = vmul.f32 %v535, %v555
          %v717 = vmul.f32 %v538, %v556
          %v718 = vmul.f32 %v540, %v557
          %v719 = vmul.f32 %v687, %v558
          %v720 = vmul.f32 %v688, %v559
          %v721 = vmul.f32 %v689, %v560
          %v722 = vmul.f32 %v690, %v561
          %v723 = vmul.f32 %v691, %v562
          %v724 = vmul.f32 %v692, %v563
          %v725 = vmul.f32 %v693, %v564
          %v726 = vmul.f32 %v694, %v565
          %v727 = vmul.f32 %v695, %v566
          %v728 = vmul.f32 %v696, %v567
          %v729 = vmul.f32 %v697, %v568
          %v730 = vmul.f32 %v698, %v569
          %v731 = vmul.f32 %v699, %v570
          %v732 = vmul.f32 %v700, %v571
          %v733 = vmul.f32 %v701, %v572
          %v734 = vmul.f32 %v702, %v573
          %v735 = vadd.f32 %v703, %v719
          %v736 = vadd.f32 %v704, %v720
          %v737 = vadd.f32 %v705, %v721
          %v738 = vadd.f32 %v706, %v722
          %v739 = vadd.f32 %v707, %v723
          %v740 = vadd.f32 %v708, %v724
          %v741 = vadd.f32 %v709, %v725
          %v742 = vadd.f32 %v710, %v726
          %v743 = vadd.f32 %v711, %v727
          %v744 = vadd.f32 %v712, %v728
          %v745 = vadd.f32 %v713, %v729
          %v746 = vadd.f32 %v714, %v730
          %v747 = vadd.f32 %v715, %v731
          %v748 = vadd.f32 %v716, %v732
          %v749 = vadd.f32 %v717, %v733
          %v750 = vadd.f32 %v718, %v734
          %v751 = vpack.c.bf16 %v735, %v735
          %v752 = vpack.c.bf16 %v736, %v736
          %v753 = vpack.c.bf16 %v737, %v737
          %v754 = vpack.c.bf16 %v738, %v738
          %v755 = vpack.c.bf16 %v739, %v739
          %v756 = vpack.c.bf16 %v740, %v740
          %v757 = vpack.c.bf16 %v741, %v741
          %v758 = vpack.c.bf16 %v742, %v742
          %v759 = vpack.c.bf16 %v743, %v743
          %v760 = vpack.c.bf16 %v744, %v744
          %v761 = vpack.c.bf16 %v745, %v745
          %v762 = vpack.c.bf16 %v746, %v746
          %v763 = vpack.c.bf16 %v747, %v747
          %v764 = vpack.c.bf16 %v748, %v748
          %v765 = vpack.c.bf16 %v749, %v749
          %v766 = vpack.c.bf16 %v750, %v750
          %vm767 = vcmask 125952
          %768 = vst.msk [vmem:[#allocation2] sm:$0xf] %vm767, %v751
          %769 = vst.msk [vmem:[#allocation2 + $0x4] sm:$0xf] %vm767, %v752
          %770 = vst.msk [vmem:[#allocation2 + $0x8] sm:$0xf] %vm767, %v753
          %771 = vst.msk [vmem:[#allocation2 + $0xc] sm:$0xf] %vm767, %v754
          %772 = vst.msk [vmem:[#allocation2 + $0x10] sm:$0xf] %vm767, %v755
          %773 = vst.msk [vmem:[#allocation2 + $0x14] sm:$0xf] %vm767, %v756
          %774 = vst.msk [vmem:[#allocation2 + $0x18] sm:$0xf] %vm767, %v757
          %775 = vst.msk [vmem:[#allocation2 + $0x1c] sm:$0xf] %vm767, %v758
          %776 = vst.msk [vmem:[#allocation2 + $0x20] sm:$0xf] %vm767, %v759
          %777 = vst.msk [vmem:[#allocation2 + $0x24] sm:$0xf] %vm767, %v760
          %778 = vst.msk [vmem:[#allocation2 + $0x28] sm:$0xf] %vm767, %v761
          %779 = vst.msk [vmem:[#allocation2 + $0x2c] sm:$0xf] %vm767, %v762
          %780 = vst.msk [vmem:[#allocation2 + $0x30] sm:$0xf] %vm767, %v763
          %781 = vst.msk [vmem:[#allocation2 + $0x34] sm:$0xf] %vm767, %v764
          %782 = vst.msk [vmem:[#allocation2 + $0x38] sm:$0xf] %vm767, %v765
          %783 = vst.msk [vmem:[#allocation2 + $0x3c] sm:$0xf] %vm767, %v766
          %784 = vrot.lane.b32.xlu0 %v503, 104
          %v785 = vpop.permute.xlu0 %784
          %786 = vrot.lane.b32.xlu0 %v505, 104
          %v787 = vpop.permute.xlu0 %786
          %788 = vrot.lane.b32.xlu0 %v508, 104
          %v789 = vpop.permute.xlu0 %788
          %790 = vrot.lane.b32.xlu0 %v510, 104
          %v791 = vpop.permute.xlu0 %790
          %792 = vrot.lane.b32.xlu0 %v513, 104
          %v793 = vpop.permute.xlu0 %792
          %794 = vrot.lane.b32.xlu0 %v515, 104
          %v795 = vpop.permute.xlu0 %794
          %796 = vrot.lane.b32.xlu0 %v518, 104
          %v797 = vpop.permute.xlu0 %796
          %798 = vrot.lane.b32.xlu0 %v520, 104
          %v799 = vpop.permute.xlu0 %798
          %800 = vrot.lane.b32.xlu0 %v523, 104
          %v801 = vpop.permute.xlu0 %800
          %802 = vrot.lane.b32.xlu0 %v525, 104
          %v803 = vpop.permute.xlu0 %802
          %804 = vrot.lane.b32.xlu0 %v528, 104
          %v805 = vpop.permute.xlu0 %804
          %806 = vrot.lane.b32.xlu0 %v530, 104
          %v807 = vpop.permute.xlu0 %806
          %808 = vrot.lane.b32.xlu0 %v533, 104
          %v809 = vpop.permute.xlu0 %808
          %810 = vrot.lane.b32.xlu0 %v535, 104
          %v811 = vpop.permute.xlu0 %810
          %812 = vrot.lane.b32.xlu0 %v538, 104
          %v813 = vpop.permute.xlu0 %812
          %814 = vrot.lane.b32.xlu0 %v540, 104
          %v815 = vpop.permute.xlu0 %814
          %v832 = vsel %vm686, %v785, %v591
          %v833 = vsel %vm686, %v787, %v593
          %v834 = vsel %vm686, %v789, %v595
          %v835 = vsel %vm686, %v791, %v597
          %v836 = vsel %vm686, %v793, %v599
          %v837 = vsel %vm686, %v795, %v601
          %v838 = vsel %vm686, %v797, %v603
          %v839 = vsel %vm686, %v799, %v605
          %v840 = vsel %vm686, %v801, %v607
          %v841 = vsel %vm686, %v803, %v609
          %v842 = vsel %vm686, %v805, %v611
          %v843 = vsel %vm686, %v807, %v613
          %v844 = vsel %vm686, %v809, %v615
          %v845 = vsel %vm686, %v811, %v617
          %v846 = vsel %vm686, %v813, %v619
          %v847 = vsel %vm686, %v815, %v621
          %864 = vrot.lane.b32.xlu0 %v542, 16
          %v865 = vpop.permute.xlu0 %864
          %866 = vrot.lane.b32.xlu0 %v543, 16
          %v867 = vpop.permute.xlu0 %866
          %868 = vrot.lane.b32.xlu0 %v544, 16
          %v869 = vpop.permute.xlu0 %868
          %870 = vrot.lane.b32.xlu0 %v545, 16
          %v871 = vpop.permute.xlu0 %870
          %872 = vrot.lane.b32.xlu0 %v546, 16
          %v873 = vpop.permute.xlu0 %872
          %874 = vrot.lane.b32.xlu0 %v547, 16
          %v875 = vpop.permute.xlu0 %874
          %876 = vrot.lane.b32.xlu0 %v548, 16
          %v877 = vpop.permute.xlu0 %876
          %878 = vrot.lane.b32.xlu0 %v549, 16
          %v879 = vpop.permute.xlu0 %878
          %880 = vrot.lane.b32.xlu0 %v550, 16
          %v881 = vpop.permute.xlu0 %880
          %882 = vrot.lane.b32.xlu0 %v551, 16
          %v883 = vpop.permute.xlu0 %882
          %884 = vrot.lane.b32.xlu0 %v552, 16
          %v885 = vpop.permute.xlu0 %884
          %886 = vrot.lane.b32.xlu0 %v553, 16
          %v887 = vpop.permute.xlu0 %886
          %888 = vrot.lane.b32.xlu0 %v554, 16
          %v889 = vpop.permute.xlu0 %888
          %890 = vrot.lane.b32.xlu0 %v555, 16
          %v891 = vpop.permute.xlu0 %890
          %892 = vrot.lane.b32.xlu0 %v556, 16
          %v893 = vpop.permute.xlu0 %892
          %894 = vrot.lane.b32.xlu0 %v557, 16
          %v895 = vpop.permute.xlu0 %894
          %v912 = vmul.f32 %v503, %v865
          %v913 = vmul.f32 %v505, %v867
          %v914 = vmul.f32 %v508, %v869
          %v915 = vmul.f32 %v510, %v871
          %v916 = vmul.f32 %v513, %v873
          %v917 = vmul.f32 %v515, %v875
          %v918 = vmul.f32 %v518, %v877
          %v919 = vmul.f32 %v520, %v879
          %v920 = vmul.f32 %v523, %v881
          %v921 = vmul.f32 %v525, %v883
          %v922 = vmul.f32 %v528, %v885
          %v923 = vmul.f32 %v530, %v887
          %v924 = vmul.f32 %v533, %v889
          %v925 = vmul.f32 %v535, %v891
          %v926 = vmul.f32 %v538, %v893
          %v927 = vmul.f32 %v540, %v895
          %v928 = vmul.f32 %v832, %v558
          %v929 = vmul.f32 %v833, %v559
          %v930 = vmul.f32 %v834, %v560
          %v931 = vmul.f32 %v835, %v561
          %v932 = vmul.f32 %v836, %v562
          %v933 = vmul.f32 %v837, %v563
          %v934 = vmul.f32 %v838, %v564
          %v935 = vmul.f32 %v839, %v565
          %v936 = vmul.f32 %v840, %v566
          %v937 = vmul.f32 %v841, %v567
          %v938 = vmul.f32 %v842, %v568
          %v939 = vmul.f32 %v843, %v569
          %v940 = vmul.f32 %v844, %v570
          %v941 = vmul.f32 %v845, %v571
          %v942 = vmul.f32 %v846, %v572
          %v943 = vmul.f32 %v847, %v573
          %960 = vrot.lane.b32.xlu0 %v928, 16
          %v961 = vpop.permute.xlu0 %960
          %962 = vrot.lane.b32.xlu0 %v929, 16
          %v963 = vpop.permute.xlu0 %962
          %964 = vrot.lane.b32.xlu0 %v930, 16
          %v965 = vpop.permute.xlu0 %964
          %966 = vrot.lane.b32.xlu0 %v931, 16
          %v967 = vpop.permute.xlu0 %966
          %968 = vrot.lane.b32.xlu0 %v932, 16
          %v969 = vpop.permute.xlu0 %968
          %970 = vrot.lane.b32.xlu0 %v933, 16
          %v971 = vpop.permute.xlu0 %970
          %972 = vrot.lane.b32.xlu0 %v934, 16
          %v973 = vpop.permute.xlu0 %972
          %974 = vrot.lane.b32.xlu0 %v935, 16
          %v975 = vpop.permute.xlu0 %974
          %976 = vrot.lane.b32.xlu0 %v936, 16
          %v977 = vpop.permute.xlu0 %976
          %978 = vrot.lane.b32.xlu0 %v937, 16
          %v979 = vpop.permute.xlu0 %978
          %980 = vrot.lane.b32.xlu0 %v938, 16
          %v981 = vpop.permute.xlu0 %980
          %982 = vrot.lane.b32.xlu0 %v939, 16
          %v983 = vpop.permute.xlu0 %982
          %984 = vrot.lane.b32.xlu0 %v940, 16
          %v985 = vpop.permute.xlu0 %984
          %986 = vrot.lane.b32.xlu0 %v941, 16
          %v987 = vpop.permute.xlu0 %986
          %988 = vrot.lane.b32.xlu0 %v942, 16
          %v989 = vpop.permute.xlu0 %988
          %990 = vrot.lane.b32.xlu0 %v943, 16
          %v991 = vpop.permute.xlu0 %990
          %v1008 = vadd.f32 %v912, %v961
          %v1009 = vadd.f32 %v913, %v963
          %v1010 = vadd.f32 %v914, %v965
          %v1011 = vadd.f32 %v915, %v967
          %v1012 = vadd.f32 %v916, %v969
          %v1013 = vadd.f32 %v917, %v971
          %v1014 = vadd.f32 %v918, %v973
          %v1015 = vadd.f32 %v919, %v975
          %v1016 = vadd.f32 %v920, %v977
          %v1017 = vadd.f32 %v921, %v979
          %v1018 = vadd.f32 %v922, %v981
          %v1019 = vadd.f32 %v923, %v983
          %v1020 = vadd.f32 %v924, %v985
          %v1021 = vadd.f32 %v925, %v987
          %v1022 = vadd.f32 %v926, %v989
          %v1023 = vadd.f32 %v927, %v991
          %v1024 = vpack.c.bf16 %v1008, %v1008
          %v1025 = vpack.c.bf16 %v1009, %v1009
          %v1026 = vpack.c.bf16 %v1010, %v1010
          %v1027 = vpack.c.bf16 %v1011, %v1011
          %v1028 = vpack.c.bf16 %v1012, %v1012
          %v1029 = vpack.c.bf16 %v1013, %v1013
          %v1030 = vpack.c.bf16 %v1014, %v1014
          %v1031 = vpack.c.bf16 %v1015, %v1015
          %v1032 = vpack.c.bf16 %v1016, %v1016
          %v1033 = vpack.c.bf16 %v1017, %v1017
          %v1034 = vpack.c.bf16 %v1018, %v1018
          %v1035 = vpack.c.bf16 %v1019, %v1019
          %v1036 = vpack.c.bf16 %v1020, %v1020
          %v1037 = vpack.c.bf16 %v1021, %v1021
          %v1038 = vpack.c.bf16 %v1022, %v1022
          %v1039 = vpack.c.bf16 %v1023, %v1023
          %1056 = vrot.lane.b32.xlu0 %v1024, 112
          %v1057 = vpop.permute.xlu0 %1056
          %1058 = vrot.lane.b32.xlu0 %v1025, 112
          %v1059 = vpop.permute.xlu0 %1058
          %1060 = vrot.lane.b32.xlu0 %v1026, 112
          %v1061 = vpop.permute.xlu0 %1060
          %1062 = vrot.lane.b32.xlu0 %v1027, 112
          %v1063 = vpop.permute.xlu0 %1062
          %1064 = vrot.lane.b32.xlu0 %v1028, 112
          %v1065 = vpop.permute.xlu0 %1064
          %1066 = vrot.lane.b32.xlu0 %v1029, 112
          %v1067 = vpop.permute.xlu0 %1066
          %1068 = vrot.lane.b32.xlu0 %v1030, 112
          %v1069 = vpop.permute.xlu0 %1068
          %1070 = vrot.lane.b32.xlu0 %v1031, 112
          %v1071 = vpop.permute.xlu0 %1070
          %1072 = vrot.lane.b32.xlu0 %v1032, 112
          %v1073 = vpop.permute.xlu0 %1072
          %1074 = vrot.lane.b32.xlu0 %v1033, 112
          %v1075 = vpop.permute.xlu0 %1074
          %1076 = vrot.lane.b32.xlu0 %v1034, 112
          %v1077 = vpop.permute.xlu0 %1076
          %1078 = vrot.lane.b32.xlu0 %v1035, 112
          %v1079 = vpop.permute.xlu0 %1078
          %1080 = vrot.lane.b32.xlu0 %v1036, 112
          %v1081 = vpop.permute.xlu0 %1080
          %1082 = vrot.lane.b32.xlu0 %v1037, 112
          %v1083 = vpop.permute.xlu0 %1082
          %1084 = vrot.lane.b32.xlu0 %v1038, 112
          %v1085 = vpop.permute.xlu0 %1084
          %1086 = vrot.lane.b32.xlu0 %v1039, 112
          %v1087 = vpop.permute.xlu0 %1086
          %1104 = vst.msk [vmem:[#allocation3] sm:$0xf] %vm767, %v1057
          %1105 = vst.msk [vmem:[#allocation3 + $0x4] sm:$0xf] %vm767, %v1059
          %1106 = vst.msk [vmem:[#allocation3 + $0x8] sm:$0xf] %vm767, %v1061
          %1107 = vst.msk [vmem:[#allocation3 + $0xc] sm:$0xf] %vm767, %v1063
          %1108 = vst.msk [vmem:[#allocation3 + $0x10] sm:$0xf] %vm767, %v1065
          %1109 = vst.msk [vmem:[#allocation3 + $0x14] sm:$0xf] %vm767, %v1067
          %1110 = vst.msk [vmem:[#allocation3 + $0x18] sm:$0xf] %vm767, %v1069
          %1111 = vst.msk [vmem:[#allocation3 + $0x1c] sm:$0xf] %vm767, %v1071
          %1112 = vst.msk [vmem:[#allocation3 + $0x20] sm:$0xf] %vm767, %v1073
          %1113 = vst.msk [vmem:[#allocation3 + $0x24] sm:$0xf] %vm767, %v1075
          %1114 = vst.msk [vmem:[#allocation3 + $0x28] sm:$0xf] %vm767, %v1077
          %1115 = vst.msk [vmem:[#allocation3 + $0x2c] sm:$0xf] %vm767, %v1079
          %1116 = vst.msk [vmem:[#allocation3 + $0x30] sm:$0xf] %vm767, %v1081
          %1117 = vst.msk [vmem:[#allocation3 + $0x34] sm:$0xf] %vm767, %v1083
          %1118 = vst.msk [vmem:[#allocation3 + $0x38] sm:$0xf] %vm767, %v1085
          %1119 = vst.msk [vmem:[#allocation3 + $0x3c] sm:$0xf] %vm767, %v1087
          %v1120 = vpack.c.bf16 %v505, %v503
          %v1121 = vpack.c.bf16 %v510, %v508
          %v1122 = vpack.c.bf16 %v515, %v513
          %v1123 = vpack.c.bf16 %v520, %v518
          %v1124 = vpack.c.bf16 %v525, %v523
          %v1125 = vpack.c.bf16 %v530, %v528
          %v1126 = vpack.c.bf16 %v535, %v533
          %v1127 = vpack.c.bf16 %v540, %v538
          %v1128 = vld [vmem:[%s3] sm:$0x3]
          %v1129 = vld [vmem:[%s5] sm:$0xf]
          %1131 = vset.pattern.permute.xlu0 0
          %1132 = vperm.xlu0 %1131, %v1129
          %v1133 = vpop.permute.xlu0 %1132
          %v1136 = vsel %vm468, %v1128, 0
          %v1139 = vsel %vm468, %v1120, 0
          %v1142 = vsel %vm468, %v1121, 0
          %v1145 = vsel %vm468, %v1122, 0
          %v1148 = vsel %vm468, %v1123, 0
          %v1151 = vsel %vm468, %v1124, 0
          %v1154 = vsel %vm468, %v1125, 0
          %v1157 = vsel %vm468, %v1126, 0
          %v1160 = vsel %vm468, %v1127, 0
          %1162 = vmatpush.bf16.xpose.msra.mxu0 %v1160
          %1163 = vmatpush.bf16.xpose.msra.mxu0 %v1157
          %1164 = vmatpush.bf16.xpose.msra.mxu0 %v1154
          %1165 = vmatpush.bf16.xpose.msra.mxu0 %v1151
          %1166 = vmatpush.bf16.xpose.msra.mxu0 %v1148
          %1167 = vmatpush.bf16.xpose.msra.mxu0 %v1145
          %1168 = vmatpush.bf16.xpose.msra.mxu0 %v1142
          %1169 = vmatpush.bf16.xpose.msra.mxu0 %v1139
          %1170 = vmatmul.bf16.gmra.mxu0 %v1136
          %v1171 = vpop.f32.mrf.mxu0
          %v1172 = vadd.f32 %v1133, %v1171
          %v1173 = vpop.f32.mrf.mxu0
          %1174 = vdwg.mxu0
          %1175 = vst [vmem:[#allocation4] sm:$0xf] %v1172
          %v1176 = vld [vmem:[%s4] sm:$0xf]
          %v1177 = vld [vmem:[%s4 + $0x4] sm:$0xf]
          %v1178 = vld [vmem:[%s4 + $0x8] sm:$0xf]
          %v1179 = vld [vmem:[%s4 + $0xc] sm:$0xf]
          %v1180 = vld [vmem:[%s6] sm:$0x1]
          %v1182 = vperm.slane %v1180, 0
          %v1188 = vunpack.c.l.b16 %v1176
          %v1189 = vunpack.c.l.b16 %v1177
          %v1190 = vunpack.c.l.b16 %v1178
          %v1191 = vunpack.c.l.b16 %v1179
          %v1192 = vpack.c.b16 %v1189, %v1188
          %v1193 = vpack.c.b16 %v1191, %v1190
          %1196 = vmatpush.bf16.msra.mxu0 0
          %1197 = vmatpush.bf16.msra.mxu0 0
          %1198 = vmatpush.bf16.msra.mxu0 0
          %1199 = vmatpush.bf16.msra.mxu0 0
          %1200 = vmatpush.bf16.msra.mxu0 0
          %1201 = vmatpush.bf16.msra.mxu0 0
          %1202 = vmatpush.bf16.msra.mxu0 %v1193
          %1203 = vmatpush.bf16.msra.mxu0 %v1192
          %1204 = vmatmul.bf16.gmra.mxu0 %v1139
          %v1205 = vpop.f32.mrf.mxu0
          %v1206 = vadd.f32 %v1182, %v1205
          %v1207 = vpop.f32.mrf.mxu0
          %v1208 = vadd.f32 %v1182, %v1207
          %1209 = vmatmul.bf16.gmra.mxu0 %v1142
          %v1210 = vpop.f32.mrf.mxu0
          %v1211 = vadd.f32 %v1182, %v1210
          %v1212 = vpop.f32.mrf.mxu0
          %v1213 = vadd.f32 %v1182, %v1212
          %1214 = vmatmul.bf16.gmra.mxu0 %v1145
          %v1215 = vpop.f32.mrf.mxu0
          %v1216 = vadd.f32 %v1182, %v1215
          %v1217 = vpop.f32.mrf.mxu0
          %v1218 = vadd.f32 %v1182, %v1217
          %1219 = vmatmul.bf16.gmra.mxu0 %v1148
          %v1220 = vpop.f32.mrf.mxu0
          %v1221 = vadd.f32 %v1182, %v1220
          %v1222 = vpop.f32.mrf.mxu0
          %v1223 = vadd.f32 %v1182, %v1222
          %1224 = vmatmul.bf16.gmra.mxu0 %v1151
          %v1225 = vpop.f32.mrf.mxu0
          %v1226 = vadd.f32 %v1182, %v1225
          %v1227 = vpop.f32.mrf.mxu0
          %v1228 = vadd.f32 %v1182, %v1227
          %1229 = vmatmul.bf16.gmra.mxu0 %v1154
          %v1230 = vpop.f32.mrf.mxu0
          %v1231 = vadd.f32 %v1182, %v1230
          %v1232 = vpop.f32.mrf.mxu0
          %v1233 = vadd.f32 %v1182, %v1232
          %1234 = vmatmul.bf16.gmra.mxu0 %v1157
          %v1235 = vpop.f32.mrf.mxu0
          %v1236 = vadd.f32 %v1182, %v1235
          %v1237 = vpop.f32.mrf.mxu0
          %v1238 = vadd.f32 %v1182, %v1237
          %1239 = vmatmul.bf16.gmra.mxu0 %v1160
          %v1240 = vpop.f32.mrf.mxu0
          %v1241 = vadd.f32 %v1182, %v1240
          %v1242 = vpop.f32.mrf.mxu0
          %v1243 = vadd.f32 %v1182, %v1242
          %1244 = vdwg.mxu0
          %vm1245 = vcmask 31744
          %1246 = vst.msk [vmem:[#allocation5] sm:$0xff] %vm1245, %v1206
          %1247 = vst.msk [vmem:[#allocation5 + $0x8] sm:$0xff] %vm1245, %v1208
          %1248 = vst.msk [vmem:[#allocation5 + $0x10] sm:$0xff] %vm1245, %v1211
          %1249 = vst.msk [vmem:[#allocation5 + $0x18] sm:$0xff] %vm1245, %v1213
          %1250 = vst.msk [vmem:[#allocation5 + $0x20] sm:$0xff] %vm1245, %v1216
          %1251 = vst.msk [vmem:[#allocation5 + $0x28] sm:$0xff] %vm1245, %v1218
          %1252 = vst.msk [vmem:[#allocation5 + $0x30] sm:$0xff] %vm1245, %v1221
          %1253 = vst.msk [vmem:[#allocation5 + $0x38] sm:$0xff] %vm1245, %v1223
          %1254 = vst.msk [vmem:[#allocation5 + $0x40] sm:$0xff] %vm1245, %v1226
          %1255 = vst.msk [vmem:[#allocation5 + $0x48] sm:$0xff] %vm1245, %v1228
          %1256 = vst.msk [vmem:[#allocation5 + $0x50] sm:$0xff] %vm1245, %v1231
          %1257 = vst.msk [vmem:[#allocation5 + $0x58] sm:$0xff] %vm1245, %v1233
          %1258 = vst.msk [vmem:[#allocation5 + $0x60] sm:$0xff] %vm1245, %v1236
          %1259 = vst.msk [vmem:[#allocation5 + $0x68] sm:$0xff] %vm1245, %v1238
          %1260 = vst.msk [vmem:[#allocation5 + $0x70] sm:$0xff] %vm1245, %v1241
          %1261 = vst.msk [vmem:[#allocation5 + $0x78] sm:$0xff] %vm1245, %v1243
        $region64: #{tpu_custom_call.1} parent=59 // pred_fallthru
          _
        %s1262 = smul.u32 %s29, 128
        %s1263 = sshra.s32 %s1262, 3
        %s1264 = sand.u32 %s1262, 7
        %s1265 = smul.addr %s1263, 4
        %s1266 = scalar_lea.vmem [#allocation2], %s1265
        %v1267 = vld [vmem:[%s1266] sm:$0xf]
        %v1268 = vld [vmem:[%s1266 + $0x4] sm:$0xf]
        %v1269 = vld [vmem:[%s1266 + $0x8] sm:$0xf]
        %v1270 = vld [vmem:[%s1266 + $0xc] sm:$0xf]
        %v1271 = vld [vmem:[%s1266 + $0x10] sm:$0xf]
        %v1272 = vld [vmem:[%s1266 + $0x14] sm:$0xf]
        %v1273 = vld [vmem:[%s1266 + $0x18] sm:$0xf]
        %v1274 = vld [vmem:[%s1266 + $0x1c] sm:$0xf]
        %v1275 = vld [vmem:[%s1266 + $0x20] sm:$0xf]
        %v1276 = vld [vmem:[%s1266 + $0x24] sm:$0xf]
        %v1277 = vld [vmem:[%s1266 + $0x28] sm:$0xf]
        %v1278 = vld [vmem:[%s1266 + $0x2c] sm:$0xf]
        %v1279 = vld [vmem:[%s1266 + $0x30] sm:$0xf]
        %v1280 = vld [vmem:[%s1266 + $0x34] sm:$0xf]
        %v1281 = vld [vmem:[%s1266 + $0x38] sm:$0xf]
        %v1282 = vld [vmem:[%s1266 + $0x3c] sm:$0xf]
        %v1283 = vld [vmem:[#allocation3] sm:$0xf]
        %v1284 = vld [vmem:[#allocation3 + $0x4] sm:$0xf]
        %v1285 = vld [vmem:[#allocation3 + $0x8] sm:$0xf]
        %v1286 = vld [vmem:[#allocation3 + $0xc] sm:$0xf]
        %v1287 = vld [vmem:[#allocation3 + $0x10] sm:$0xf]
        %v1288 = vld [vmem:[#allocation3 + $0x14] sm:$0xf]
        %v1289 = vld [vmem:[#allocation3 + $0x18] sm:$0xf]
        %v1290 = vld [vmem:[#allocation3 + $0x1c] sm:$0xf]
        %v1291 = vld [vmem:[#allocation3 + $0x20] sm:$0xf]
        %v1292 = vld [vmem:[#allocation3 + $0x24] sm:$0xf]
        %v1293 = vld [vmem:[#allocation3 + $0x28] sm:$0xf]
        %v1294 = vld [vmem:[#allocation3 + $0x2c] sm:$0xf]
        %v1295 = vld [vmem:[#allocation3 + $0x30] sm:$0xf]
        %v1296 = vld [vmem:[#allocation3 + $0x34] sm:$0xf]
        %v1297 = vld [vmem:[#allocation3 + $0x38] sm:$0xf]
        %v1298 = vld [vmem:[#allocation3 + $0x3c] sm:$0xf]
        %v1315 = vunpack.c.l.b16 %v1267
        %v1316 = vunpack.c.l.b16 %v1268
        %v1317 = vunpack.c.l.b16 %v1269
        %v1318 = vunpack.c.l.b16 %v1270
        %v1319 = vunpack.c.l.b16 %v1271
        %v1320 = vunpack.c.l.b16 %v1272
        %v1321 = vunpack.c.l.b16 %v1273
        %v1322 = vunpack.c.l.b16 %v1274
        %v1323 = vunpack.c.l.b16 %v1275
        %v1324 = vunpack.c.l.b16 %v1276
        %v1325 = vunpack.c.l.b16 %v1277
        %v1326 = vunpack.c.l.b16 %v1278
        %v1327 = vunpack.c.l.b16 %v1279
        %v1328 = vunpack.c.l.b16 %v1280
        %v1329 = vunpack.c.l.b16 %v1281
        %v1330 = vunpack.c.l.b16 %v1282
        %v1331 = vpack.c.b16 %v1316, %v1315
        %v1332 = vpack.c.b16 %v1318, %v1317
        %v1333 = vpack.c.b16 %v1320, %v1319
        %v1334 = vpack.c.b16 %v1322, %v1321
        %v1335 = vpack.c.b16 %v1324, %v1323
        %v1336 = vpack.c.b16 %v1326, %v1325
        %v1337 = vpack.c.b16 %v1328, %v1327
        %v1338 = vpack.c.b16 %v1330, %v1329
        %v1355 = vunpack.c.l.b16 %v1283
        %v1356 = vunpack.c.l.b16 %v1284
        %v1357 = vunpack.c.l.b16 %v1285
        %v1358 = vunpack.c.l.b16 %v1286
        %v1359 = vunpack.c.l.b16 %v1287
        %v1360 = vunpack.c.l.b16 %v1288
        %v1361 = vunpack.c.l.b16 %v1289
        %v1362 = vunpack.c.l.b16 %v1290
        %v1363 = vunpack.c.l.b16 %v1291
        %v1364 = vunpack.c.l.b16 %v1292
        %v1365 = vunpack.c.l.b16 %v1293
        %v1366 = vunpack.c.l.b16 %v1294
        %v1367 = vunpack.c.l.b16 %v1295
        %v1368 = vunpack.c.l.b16 %v1296
        %v1369 = vunpack.c.l.b16 %v1297
        %v1370 = vunpack.c.l.b16 %v1298
        %v1371 = vpack.c.b16 %v1356, %v1355
        %v1372 = vpack.c.b16 %v1358, %v1357
        %v1373 = vpack.c.b16 %v1360, %v1359
        %v1374 = vpack.c.b16 %v1362, %v1361
        %v1375 = vpack.c.b16 %v1364, %v1363
        %v1376 = vpack.c.b16 %v1366, %v1365
        %v1377 = vpack.c.b16 %v1368, %v1367
        %v1378 = vpack.c.b16 %v1370, %v1369
        %vm1379 = vcmask 130048
        %v1381 = vsel %vm1379, %v1331, 0
        %v1384 = vsel %vm1379, %v1332, 0
        %v1387 = vsel %vm1379, %v1333, 0
        %v1390 = vsel %vm1379, %v1334, 0
        %v1393 = vsel %vm1379, %v1335, 0
        %v1396 = vsel %vm1379, %v1336, 0
        %v1399 = vsel %vm1379, %v1337, 0
        %v1402 = vsel %vm1379, %v1338, 0
        %v1405 = vsel %vm1379, %v1371, 0
        %v1408 = vsel %vm1379, %v1372, 0
        %v1411 = vsel %vm1379, %v1373, 0
        %v1414 = vsel %vm1379, %v1374, 0
        %v1417 = vsel %vm1379, %v1375, 0
        %v1420 = vsel %vm1379, %v1376, 0
        %v1423 = vsel %vm1379, %v1377, 0
        %v1426 = vsel %vm1379, %v1378, 0
        %1428 = vmatpush.bf16.xpose.msra.mxu0 %v1426
        %1429 = vmatpush.bf16.xpose.msra.mxu0 %v1423
        %1430 = vmatpush.bf16.xpose.msra.mxu0 %v1420
        %1431 = vmatpush.bf16.xpose.msra.mxu0 %v1417
        %1432 = vmatpush.bf16.xpose.msra.mxu0 %v1414
        %1433 = vmatpush.bf16.xpose.msra.mxu0 %v1411
        %1434 = vmatpush.bf16.xpose.msra.mxu0 %v1408
        %1435 = vmatpush.bf16.xpose.msra.mxu0 %v1405
        %1436 = vmatmul.bf16.gmra.mxu0 %v1381
        %v1437 = vpop.f32.mrf.mxu0
        %v1438 = vadd.f32 0.0, %v1437
        %v1439 = vpop.f32.mrf.mxu0
        %v1440 = vadd.f32 0.0, %v1439
        %1441 = vmatmul.bf16.gmra.mxu0 %v1384
        %v1442 = vpop.f32.mrf.mxu0
        %v1443 = vadd.f32 0.0, %v1442
        %v1444 = vpop.f32.mrf.mxu0
        %v1445 = vadd.f32 0.0, %v1444
        %1446 = vmatmul.bf16.gmra.mxu0 %v1387
        %v1447 = vpop.f32.mrf.mxu0
        %v1448 = vadd.f32 0.0, %v1447
        %v1449 = vpop.f32.mrf.mxu0
        %v1450 = vadd.f32 0.0, %v1449
        %1451 = vmatmul.bf16.gmra.mxu0 %v1390
        %v1452 = vpop.f32.mrf.mxu0
        %v1453 = vadd.f32 0.0, %v1452
        %v1454 = vpop.f32.mrf.mxu0
        %v1455 = vadd.f32 0.0, %v1454
        %1456 = vmatmul.bf16.gmra.mxu0 %v1393
        %v1457 = vpop.f32.mrf.mxu0
        %v1458 = vadd.f32 0.0, %v1457
        %v1459 = vpop.f32.mrf.mxu0
        %v1460 = vadd.f32 0.0, %v1459
        %1461 = vmatmul.bf16.gmra.mxu0 %v1396
        %v1462 = vpop.f32.mrf.mxu0
        %v1463 = vadd.f32 0.0, %v1462
        %v1464 = vpop.f32.mrf.mxu0
        %v1465 = vadd.f32 0.0, %v1464
        %1466 = vmatmul.bf16.gmra.mxu0 %v1399
        %v1467 = vpop.f32.mrf.mxu0
        %v1468 = vadd.f32 0.0, %v1467
        %v1469 = vpop.f32.mrf.mxu0
        %v1470 = vadd.f32 0.0, %v1469
        %1471 = vmatmul.bf16.gmra.mxu0 %v1402
        %v1472 = vpop.f32.mrf.mxu0
        %v1473 = vadd.f32 0.0, %v1472
        %v1474 = vpop.f32.mrf.mxu0
        %v1475 = vadd.f32 0.0, %v1474
        %1476 = vdwg.mxu0
        %v1477 = vld [vmem:[#allocation4] sm:$0xf]
        %s1478 = scalar_lea.vmem [#allocation5], %s1262
        %v1479 = vld [vmem:[%s1478] sm:$0xff]
        %v1480 = vld [vmem:[%s1478 + $0x8] sm:$0xff]
        %v1481 = vld [vmem:[%s1478 + $0x10] sm:$0xff]
        %v1482 = vld [vmem:[%s1478 + $0x18] sm:$0xff]
        %v1483 = vld [vmem:[%s1478 + $0x20] sm:$0xff]
        %v1484 = vld [vmem:[%s1478 + $0x28] sm:$0xff]
        %v1485 = vld [vmem:[%s1478 + $0x30] sm:$0xff]
        %v1486 = vld [vmem:[%s1478 + $0x38] sm:$0xff]
        %v1487 = vld [vmem:[%s1478 + $0x40] sm:$0xff]
        %v1488 = vld [vmem:[%s1478 + $0x48] sm:$0xff]
        %v1489 = vld [vmem:[%s1478 + $0x50] sm:$0xff]
        %v1490 = vld [vmem:[%s1478 + $0x58] sm:$0xff]
        %v1491 = vld [vmem:[%s1478 + $0x60] sm:$0xff]
        %v1492 = vld [vmem:[%s1478 + $0x68] sm:$0xff]
        %v1493 = vld [vmem:[%s1478 + $0x70] sm:$0xff]
        %v1494 = vld [vmem:[%s1478 + $0x78] sm:$0xff]
        %v1495 = vld [vmem:[%s385] sm:$0x1]
        %v1496 = vlaneseq
        %v1497 = vshrl.u32 %v1496, 7
        %v1498 = vadd.s32 %v1497, 8
        %v1499 = vadd.s32 %v1497, 16
        %v1500 = vadd.s32 %v1497, 24
        %v1501 = vadd.s32 %v1497, 32
        %v1502 = vadd.s32 %v1497, 40
        %v1503 = vadd.s32 %v1497, 48
        %v1504 = vadd.s32 %v1497, 56
        %v1505 = vadd.s32 %v1497, 64
        %v1506 = vadd.s32 %v1497, 72
        %v1507 = vadd.s32 %v1497, 80
        %v1508 = vadd.s32 %v1497, 88
        %v1509 = vadd.s32 %v1497, 96
        %v1510 = vadd.s32 %v1497, 104
        %v1511 = vadd.s32 %v1497, 112
        %v1512 = vadd.s32 %v1497, 120
        %v1513 = vstv %s1262
        %v1514 = vadd.s32 %v1513, %v1497
        %v1515 = vadd.s32 %v1513, %v1498
        %v1516 = vadd.s32 %v1513, %v1499
        %v1517 = vadd.s32 %v1513, %v1500
        %v1518 = vadd.s32 %v1513, %v1501
        %v1519 = vadd.s32 %v1513, %v1502
        %v1520 = vadd.s32 %v1513, %v1503
        %v1521 = vadd.s32 %v1513, %v1504
        %v1522 = vadd.s32 %v1513, %v1505
        %v1523 = vadd.s32 %v1513, %v1506
        %v1524 = vadd.s32 %v1513, %v1507
        %v1525 = vadd.s32 %v1513, %v1508
        %v1526 = vadd.s32 %v1513, %v1509
        %v1527 = vadd.s32 %v1513, %v1510
        %v1528 = vadd.s32 %v1513, %v1511
        %v1529 = vadd.s32 %v1513, %v1512
        %v1530 = vlaneseq
        %v1531 = vand.u32 %v1530, 127
        %v1532 = vsub.f32 1.0, %v1495
        %v1533 = vmul.f32 %v1532, 1e+12
        %vm1534 = vcmp.gt.s32.totalorder %v1514, %v1531
        %vm1535 = vcmp.gt.s32.totalorder %v1515, %v1531
        %vm1536 = vcmp.gt.s32.totalorder %v1516, %v1531
        %vm1537 = vcmp.gt.s32.totalorder %v1517, %v1531
        %vm1538 = vcmp.gt.s32.totalorder %v1518, %v1531
        %vm1539 = vcmp.gt.s32.totalorder %v1519, %v1531
        %vm1540 = vcmp.gt.s32.totalorder %v1520, %v1531
        %vm1541 = vcmp.gt.s32.totalorder %v1521, %v1531
        %vm1542 = vcmp.gt.s32.totalorder %v1522, %v1531
        %vm1543 = vcmp.gt.s32.totalorder %v1523, %v1531
        %vm1544 = vcmp.gt.s32.totalorder %v1524, %v1531
        %vm1545 = vcmp.gt.s32.totalorder %v1525, %v1531
        %vm1546 = vcmp.gt.s32.totalorder %v1526, %v1531
        %vm1547 = vcmp.gt.s32.totalorder %v1527, %v1531
        %vm1548 = vcmp.gt.s32.totalorder %v1528, %v1531
        %vm1549 = vcmp.gt.s32.totalorder %v1529, %v1531
        %v1550 = vsel %vm1534, 1e+12, 0.0
        %v1551 = vsel %vm1535, 1e+12, 0.0
        %v1552 = vsel %vm1536, 1e+12, 0.0
        %v1553 = vsel %vm1537, 1e+12, 0.0
        %v1554 = vsel %vm1538, 1e+12, 0.0
        %v1555 = vsel %vm1539, 1e+12, 0.0
        %v1556 = vsel %vm1540, 1e+12, 0.0
        %v1557 = vsel %vm1541, 1e+12, 0.0
        %v1558 = vsel %vm1542, 1e+12, 0.0
        %v1559 = vsel %vm1543, 1e+12, 0.0
        %v1560 = vsel %vm1544, 1e+12, 0.0
        %v1561 = vsel %vm1545, 1e+12, 0.0
        %v1562 = vsel %vm1546, 1e+12, 0.0
        %v1563 = vsel %vm1547, 1e+12, 0.0
        %v1564 = vsel %vm1548, 1e+12, 0.0
        %v1565 = vsel %vm1549, 1e+12, 0.0
        %v1567 = vperm.slane %v1533, 0
        %v1569 = vadd.f32 %v1567, %v1550
        %v1570 = vadd.f32 %v1567, %v1551
        %v1571 = vadd.f32 %v1567, %v1552
        %v1572 = vadd.f32 %v1567, %v1553
        %v1573 = vadd.f32 %v1567, %v1554
        %v1574 = vadd.f32 %v1567, %v1555
        %v1575 = vadd.f32 %v1567, %v1556
        %v1576 = vadd.f32 %v1567, %v1557
        %v1577 = vadd.f32 %v1567, %v1558
        %v1578 = vadd.f32 %v1567, %v1559
        %v1579 = vadd.f32 %v1567, %v1560
        %v1580 = vadd.f32 %v1567, %v1561
        %v1581 = vadd.f32 %v1567, %v1562
        %v1582 = vadd.f32 %v1567, %v1563
        %v1583 = vadd.f32 %v1567, %v1564
        %v1584 = vadd.f32 %v1567, %v1565
        %v1585 = vperm.slane %v1477, 0
        %v1586 = vadd.f32 %v1438, %v1585
        %v1587 = vadd.f32 %v1440, %v1585
        %v1588 = vadd.f32 %v1443, %v1585
        %v1589 = vadd.f32 %v1445, %v1585
        %v1590 = vadd.f32 %v1448, %v1585
        %v1591 = vadd.f32 %v1450, %v1585
        %v1592 = vadd.f32 %v1453, %v1585
        %v1593 = vadd.f32 %v1455, %v1585
        %v1594 = vadd.f32 %v1458, %v1585
        %v1595 = vadd.f32 %v1460, %v1585
        %v1596 = vadd.f32 %v1463, %v1585
        %v1597 = vadd.f32 %v1465, %v1585
        %v1598 = vadd.f32 %v1468, %v1585
        %v1599 = vadd.f32 %v1470, %v1585
        %v1600 = vadd.f32 %v1473, %v1585
        %v1601 = vadd.f32 %v1475, %v1585
        %1603 = vset.pattern.permute.xlu0 0
        %1604 = vperm.xlu0 %1603, %v1479
        %v1605 = vpop.permute.xlu0 %1604
        %1608 = vset.pattern.permute.xlu0 0
        %1609 = vperm.xlu0 %1608, %v1480
        %v1610 = vpop.permute.xlu0 %1609
        %1613 = vset.pattern.permute.xlu0 0
        %1614 = vperm.xlu0 %1613, %v1481
        %v1615 = vpop.permute.xlu0 %1614
        %1618 = vset.pattern.permute.xlu0 0
        %1619 = vperm.xlu0 %1618, %v1482
        %v1620 = vpop.permute.xlu0 %1619
        %1623 = vset.pattern.permute.xlu0 0
        %1624 = vperm.xlu0 %1623, %v1483
        %v1625 = vpop.permute.xlu0 %1624
        %1628 = vset.pattern.permute.xlu0 0
        %1629 = vperm.xlu0 %1628, %v1484
        %v1630 = vpop.permute.xlu0 %1629
        %1633 = vset.pattern.permute.xlu0 0
        %1634 = vperm.xlu0 %1633, %v1485
        %v1635 = vpop.permute.xlu0 %1634
        %1638 = vset.pattern.permute.xlu0 0
        %1639 = vperm.xlu0 %1638, %v1486
        %v1640 = vpop.permute.xlu0 %1639
        %1643 = vset.pattern.permute.xlu0 0
        %1644 = vperm.xlu0 %1643, %v1487
        %v1645 = vpop.permute.xlu0 %1644
        %1648 = vset.pattern.permute.xlu0 0
        %1649 = vperm.xlu0 %1648, %v1488
        %v1650 = vpop.permute.xlu0 %1649
        %1653 = vset.pattern.permute.xlu0 0
        %1654 = vperm.xlu0 %1653, %v1489
        %v1655 = vpop.permute.xlu0 %1654
        %1658 = vset.pattern.permute.xlu0 0
        %1659 = vperm.xlu0 %1658, %v1490
        %v1660 = vpop.permute.xlu0 %1659
        %1663 = vset.pattern.permute.xlu0 0
        %1664 = vperm.xlu0 %1663, %v1491
        %v1665 = vpop.permute.xlu0 %1664
        %1668 = vset.pattern.permute.xlu0 0
        %1669 = vperm.xlu0 %1668, %v1492
        %v1670 = vpop.permute.xlu0 %1669
        %1673 = vset.pattern.permute.xlu0 0
        %1674 = vperm.xlu0 %1673, %v1493
        %v1675 = vpop.permute.xlu0 %1674
        %1678 = vset.pattern.permute.xlu0 0
        %1679 = vperm.xlu0 %1678, %v1494
        %v1680 = vpop.permute.xlu0 %1679
        %v1682 = vadd.f32 %v1586, %v1605
        %v1683 = vadd.f32 %v1587, %v1610
        %v1684 = vadd.f32 %v1588, %v1615
        %v1685 = vadd.f32 %v1589, %v1620
        %v1686 = vadd.f32 %v1590, %v1625
        %v1687 = vadd.f32 %v1591, %v1630
        %v1688 = vadd.f32 %v1592, %v1635
        %v1689 = vadd.f32 %v1593, %v1640
        %v1690 = vadd.f32 %v1594, %v1645
        %v1691 = vadd.f32 %v1595, %v1650
        %v1692 = vadd.f32 %v1596, %v1655
        %v1693 = vadd.f32 %v1597, %v1660
        %v1694 = vadd.f32 %v1598, %v1665
        %v1695 = vadd.f32 %v1599, %v1670
        %v1696 = vadd.f32 %v1600, %v1675
        %v1697 = vadd.f32 %v1601, %v1680
        %v1699 = vperm.slane %v1495, 0
        %v1701 = vmul.f32 %v1682, %v1699
        %v1702 = vmul.f32 %v1683, %v1699
        %v1703 = vmul.f32 %v1684, %v1699
        %v1704 = vmul.f32 %v1685, %v1699
        %v1705 = vmul.f32 %v1686, %v1699
        %v1706 = vmul.f32 %v1687, %v1699
        %v1707 = vmul.f32 %v1688, %v1699
        %v1708 = vmul.f32 %v1689, %v1699
        %v1709 = vmul.f32 %v1690, %v1699
        %v1710 = vmul.f32 %v1691, %v1699
        %v1711 = vmul.f32 %v1692, %v1699
        %v1712 = vmul.f32 %v1693, %v1699
        %v1713 = vmul.f32 %v1694, %v1699
        %v1714 = vmul.f32 %v1695, %v1699
        %v1715 = vmul.f32 %v1696, %v1699
        %v1716 = vmul.f32 %v1697, %v1699
        %v1717 = vsub.f32 %v1701, %v1569
        %v1718 = vsub.f32 %v1702, %v1570
        %v1719 = vsub.f32 %v1703, %v1571
        %v1720 = vsub.f32 %v1704, %v1572
        %v1721 = vsub.f32 %v1705, %v1573
        %v1722 = vsub.f32 %v1706, %v1574
        %v1723 = vsub.f32 %v1707, %v1575
        %v1724 = vsub.f32 %v1708, %v1576
        %v1725 = vsub.f32 %v1709, %v1577
        %v1726 = vsub.f32 %v1710, %v1578
        %v1727 = vsub.f32 %v1711, %v1579
        %v1728 = vsub.f32 %v1712, %v1580
        %v1729 = vsub.f32 %v1713, %v1581
        %v1730 = vsub.f32 %v1714, %v1582
        %v1731 = vsub.f32 %v1715, %v1583
        %v1732 = vsub.f32 %v1716, %v1584
        %1733 = vst [vmem:[%s377] sm:$0xff] %v1717
        %1734 = vst [vmem:[%s377 + $0x8] sm:$0xff] %v1718
        %1735 = vst [vmem:[%s377 + $0x10] sm:$0xff] %v1719
        %1736 = vst [vmem:[%s377 + $0x18] sm:$0xff] %v1720
        %1737 = vst [vmem:[%s377 + $0x20] sm:$0xff] %v1721
        %1738 = vst [vmem:[%s377 + $0x28] sm:$0xff] %v1722
        %1739 = vst [vmem:[%s377 + $0x30] sm:$0xff] %v1723
        %1740 = vst [vmem:[%s377 + $0x38] sm:$0xff] %v1724
        %1741 = vst [vmem:[%s377 + $0x40] sm:$0xff] %v1725
        %1742 = vst [vmem:[%s377 + $0x48] sm:$0xff] %v1726
        %1743 = vst [vmem:[%s377 + $0x50] sm:$0xff] %v1727
        %1744 = vst [vmem:[%s377 + $0x58] sm:$0xff] %v1728
        %1745 = vst [vmem:[%s377 + $0x60] sm:$0xff] %v1729
        %1746 = vst [vmem:[%s377 + $0x68] sm:$0xff] %v1730
        %1747 = vst [vmem:[%s377 + $0x70] sm:$0xff] %v1731
        %1748 = vst [vmem:[%s377 + $0x78] sm:$0xff] %v1732
        %v1749 = vperm.slane %v1477, 1
        %v1750 = vadd.f32 %v1438, %v1749
        %v1751 = vadd.f32 %v1440, %v1749
        %v1752 = vadd.f32 %v1443, %v1749
        %v1753 = vadd.f32 %v1445, %v1749
        %v1754 = vadd.f32 %v1448, %v1749
        %v1755 = vadd.f32 %v1450, %v1749
        %v1756 = vadd.f32 %v1453, %v1749
        %v1757 = vadd.f32 %v1455, %v1749
        %v1758 = vadd.f32 %v1458, %v1749
        %v1759 = vadd.f32 %v1460, %v1749
        %v1760 = vadd.f32 %v1463, %v1749
        %v1761 = vadd.f32 %v1465, %v1749
        %v1762 = vadd.f32 %v1468, %v1749
        %v1763 = vadd.f32 %v1470, %v1749
        %v1764 = vadd.f32 %v1473, %v1749
        %v1765 = vadd.f32 %v1475, %v1749
        %1766 = vset.pattern.permute.xlu0 1
        %1767 = vperm.xlu0 %1766, %v1479
        %v1768 = vpop.permute.xlu0 %1767
        %1770 = vset.pattern.permute.xlu0 1
        %1771 = vperm.xlu0 %1770, %v1480
        %v1772 = vpop.permute.xlu0 %1771
        %1774 = vset.pattern.permute.xlu0 1
        %1775 = vperm.xlu0 %1774, %v1481
        %v1776 = vpop.permute.xlu0 %1775
        %1778 = vset.pattern.permute.xlu0 1
        %1779 = vperm.xlu0 %1778, %v1482
        %v1780 = vpop.permute.xlu0 %1779
        %1782 = vset.pattern.permute.xlu0 1
        %1783 = vperm.xlu0 %1782, %v1483
        %v1784 = vpop.permute.xlu0 %1783
        %1786 = vset.pattern.permute.xlu0 1
        %1787 = vperm.xlu0 %1786, %v1484
        %v1788 = vpop.permute.xlu0 %1787
        %1790 = vset.pattern.permute.xlu0 1
        %1791 = vperm.xlu0 %1790, %v1485
        %v1792 = vpop.permute.xlu0 %1791
        %1794 = vset.pattern.permute.xlu0 1
        %1795 = vperm.xlu0 %1794, %v1486
        %v1796 = vpop.permute.xlu0 %1795
        %1798 = vset.pattern.permute.xlu0 1
        %1799 = vperm.xlu0 %1798, %v1487
        %v1800 = vpop.permute.xlu0 %1799
        %1802 = vset.pattern.permute.xlu0 1
        %1803 = vperm.xlu0 %1802, %v1488
        %v1804 = vpop.permute.xlu0 %1803
        %1806 = vset.pattern.permute.xlu0 1
        %1807 = vperm.xlu0 %1806, %v1489
        %v1808 = vpop.permute.xlu0 %1807
        %1810 = vset.pattern.permute.xlu0 1
        %1811 = vperm.xlu0 %1810, %v1490
        %v1812 = vpop.permute.xlu0 %1811
        %1814 = vset.pattern.permute.xlu0 1
        %1815 = vperm.xlu0 %1814, %v1491
        %v1816 = vpop.permute.xlu0 %1815
        %1818 = vset.pattern.permute.xlu0 1
        %1819 = vperm.xlu0 %1818, %v1492
        %v1820 = vpop.permute.xlu0 %1819
        %1822 = vset.pattern.permute.xlu0 1
        %1823 = vperm.xlu0 %1822, %v1493
        %v1824 = vpop.permute.xlu0 %1823
        %1826 = vset.pattern.permute.xlu0 1
        %1827 = vperm.xlu0 %1826, %v1494
        %v1828 = vpop.permute.xlu0 %1827
        %v1830 = vadd.f32 %v1750, %v1768
        %v1831 = vadd.f32 %v1751, %v1772
        %v1832 = vadd.f32 %v1752, %v1776
        %v1833 = vadd.f32 %v1753, %v1780
        %v1834 = vadd.f32 %v1754, %v1784
        %v1835 = vadd.f32 %v1755, %v1788
        %v1836 = vadd.f32 %v1756, %v1792
        %v1837 = vadd.f32 %v1757, %v1796
        %v1838 = vadd.f32 %v1758, %v1800
        %v1839 = vadd.f32 %v1759, %v1804
        %v1840 = vadd.f32 %v1760, %v1808
        %v1841 = vadd.f32 %v1761, %v1812
        %v1842 = vadd.f32 %v1762, %v1816
        %v1843 = vadd.f32 %v1763, %v1820
        %v1844 = vadd.f32 %v1764, %v1824
        %v1845 = vadd.f32 %v1765, %v1828
        %v1846 = vmul.f32 %v1830, %v1699
        %v1847 = vmul.f32 %v1831, %v1699
        %v1848 = vmul.f32 %v1832, %v1699
        %v1849 = vmul.f32 %v1833, %v1699
        %v1850 = vmul.f32 %v1834, %v1699
        %v1851 = vmul.f32 %v1835, %v1699
        %v1852 = vmul.f32 %v1836, %v1699
        %v1853 = vmul.f32 %v1837, %v1699
        %v1854 = vmul.f32 %v1838, %v1699
        %v1855 = vmul.f32 %v1839, %v1699
        %v1856 = vmul.f32 %v1840, %v1699
        %v1857 = vmul.f32 %v1841, %v1699
        %v1858 = vmul.f32 %v1842, %v1699
        %v1859 = vmul.f32 %v1843, %v1699
        %v1860 = vmul.f32 %v1844, %v1699
        %v1861 = vmul.f32 %v1845, %v1699
        %v1862 = vsub.f32 %v1846, %v1569
        %v1863 = vsub.f32 %v1847, %v1570
        %v1864 = vsub.f32 %v1848, %v1571
        %v1865 = vsub.f32 %v1849, %v1572
        %v1866 = vsub.f32 %v1850, %v1573
        %v1867 = vsub.f32 %v1851, %v1574
        %v1868 = vsub.f32 %v1852, %v1575
        %v1869 = vsub.f32 %v1853, %v1576
        %v1870 = vsub.f32 %v1854, %v1577
        %v1871 = vsub.f32 %v1855, %v1578
        %v1872 = vsub.f32 %v1856, %v1579
        %v1873 = vsub.f32 %v1857, %v1580
        %v1874 = vsub.f32 %v1858, %v1581
        %v1875 = vsub.f32 %v1859, %v1582
        %v1876 = vsub.f32 %v1860, %v1583
        %v1877 = vsub.f32 %v1861, %v1584
        %s1878 = scalar_lea.vmem %s377, 128 [#allocation6]
        %1879 = vst [vmem:[%s1878] sm:$0xff] %v1862
        %1880 = vst [vmem:[%s1878 + $0x8] sm:$0xff] %v1863
        %1881 = vst [vmem:[%s1878 + $0x10] sm:$0xff] %v1864
        %1882 = vst [vmem:[%s1878 + $0x18] sm:$0xff] %v1865
        %1883 = vst [vmem:[%s1878 + $0x20] sm:$0xff] %v1866
        %1884 = vst [vmem:[%s1878 + $0x28] sm:$0xff] %v1867
        %1885 = vst [vmem:[%s1878 + $0x30] sm:$0xff] %v1868
        %1886 = vst [vmem:[%s1878 + $0x38] sm:$0xff] %v1869
        %1887 = vst [vmem:[%s1878 + $0x40] sm:$0xff] %v1870
        %1888 = vst [vmem:[%s1878 + $0x48] sm:$0xff] %v1871
        %1889 = vst [vmem:[%s1878 + $0x50] sm:$0xff] %v1872
        %1890 = vst [vmem:[%s1878 + $0x58] sm:$0xff] %v1873
        %1891 = vst [vmem:[%s1878 + $0x60] sm:$0xff] %v1874
        %1892 = vst [vmem:[%s1878 + $0x68] sm:$0xff] %v1875
        %1893 = vst [vmem:[%s1878 + $0x70] sm:$0xff] %v1876
        %1894 = vst [vmem:[%s1878 + $0x78] sm:$0xff] %v1877
        %v1895 = vperm.slane %v1477, 2
        %v1896 = vadd.f32 %v1438, %v1895
        %v1897 = vadd.f32 %v1440, %v1895
        %v1898 = vadd.f32 %v1443, %v1895
        %v1899 = vadd.f32 %v1445, %v1895
        %v1900 = vadd.f32 %v1448, %v1895
        %v1901 = vadd.f32 %v1450, %v1895
        %v1902 = vadd.f32 %v1453, %v1895
        %v1903 = vadd.f32 %v1455, %v1895
        %v1904 = vadd.f32 %v1458, %v1895
        %v1905 = vadd.f32 %v1460, %v1895
        %v1906 = vadd.f32 %v1463, %v1895
        %v1907 = vadd.f32 %v1465, %v1895
        %v1908 = vadd.f32 %v1468, %v1895
        %v1909 = vadd.f32 %v1470, %v1895
        %v1910 = vadd.f32 %v1473, %v1895
        %v1911 = vadd.f32 %v1475, %v1895
        %1912 = vset.pattern.permute.xlu0 2
        %1913 = vperm.xlu0 %1912, %v1479
        %v1914 = vpop.permute.xlu0 %1913
        %1916 = vset.pattern.permute.xlu0 2
        %1917 = vperm.xlu0 %1916, %v1480
        %v1918 = vpop.permute.xlu0 %1917
        %1920 = vset.pattern.permute.xlu0 2
        %1921 = vperm.xlu0 %1920, %v1481
        %v1922 = vpop.permute.xlu0 %1921
        %1924 = vset.pattern.permute.xlu0 2
        %1925 = vperm.xlu0 %1924, %v1482
        %v1926 = vpop.permute.xlu0 %1925
        %1928 = vset.pattern.permute.xlu0 2
        %1929 = vperm.xlu0 %1928, %v1483
        %v1930 = vpop.permute.xlu0 %1929
        %1932 = vset.pattern.permute.xlu0 2
        %1933 = vperm.xlu0 %1932, %v1484
        %v1934 = vpop.permute.xlu0 %1933
        %1936 = vset.pattern.permute.xlu0 2
        %1937 = vperm.xlu0 %1936, %v1485
        %v1938 = vpop.permute.xlu0 %1937
        %1940 = vset.pattern.permute.xlu0 2
        %1941 = vperm.xlu0 %1940, %v1486
        %v1942 = vpop.permute.xlu0 %1941
        %1944 = vset.pattern.permute.xlu0 2
        %1945 = vperm.xlu0 %1944, %v1487
        %v1946 = vpop.permute.xlu0 %1945
        %1948 = vset.pattern.permute.xlu0 2
        %1949 = vperm.xlu0 %1948, %v1488
        %v1950 = vpop.permute.xlu0 %1949
        %1952 = vset.pattern.permute.xlu0 2
        %1953 = vperm.xlu0 %1952, %v1489
        %v1954 = vpop.permute.xlu0 %1953
        %1956 = vset.pattern.permute.xlu0 2
        %1957 = vperm.xlu0 %1956, %v1490
        %v1958 = vpop.permute.xlu0 %1957
        %1960 = vset.pattern.permute.xlu0 2
        %1961 = vperm.xlu0 %1960, %v1491
        %v1962 = vpop.permute.xlu0 %1961
        %1964 = vset.pattern.permute.xlu0 2
        %1965 = vperm.xlu0 %1964, %v1492
        %v1966 = vpop.permute.xlu0 %1965
        %1968 = vset.pattern.permute.xlu0 2
        %1969 = vperm.xlu0 %1968, %v1493
        %v1970 = vpop.permute.xlu0 %1969
        %1972 = vset.pattern.permute.xlu0 2
        %1973 = vperm.xlu0 %1972, %v1494
        %v1974 = vpop.permute.xlu0 %1973
        %v1976 = vadd.f32 %v1896, %v1914
        %v1977 = vadd.f32 %v1897, %v1918
        %v1978 = vadd.f32 %v1898, %v1922
        %v1979 = vadd.f32 %v1899, %v1926
        %v1980 = vadd.f32 %v1900, %v1930
        %v1981 = vadd.f32 %v1901, %v1934
        %v1982 = vadd.f32 %v1902, %v1938
        %v1983 = vadd.f32 %v1903, %v1942
        %v1984 = vadd.f32 %v1904, %v1946
        %v1985 = vadd.f32 %v1905, %v1950
        %v1986 = vadd.f32 %v1906, %v1954
        %v1987 = vadd.f32 %v1907, %v1958
        %v1988 = vadd.f32 %v1908, %v1962
        %v1989 = vadd.f32 %v1909, %v1966
        %v1990 = vadd.f32 %v1910, %v1970
        %v1991 = vadd.f32 %v1911, %v1974
        %v1992 = vmul.f32 %v1976, %v1699
        %v1993 = vmul.f32 %v1977, %v1699
        %v1994 = vmul.f32 %v1978, %v1699
        %v1995 = vmul.f32 %v1979, %v1699
        %v1996 = vmul.f32 %v1980, %v1699
        %v1997 = vmul.f32 %v1981, %v1699
        %v1998 = vmul.f32 %v1982, %v1699
        %v1999 = vmul.f32 %v1983, %v1699
        %v2000 = vmul.f32 %v1984, %v1699
        %v2001 = vmul.f32 %v1985, %v1699
        %v2002 = vmul.f32 %v1986, %v1699
        %v2003 = vmul.f32 %v1987, %v1699
        %v2004 = vmul.f32 %v1988, %v1699
        %v2005 = vmul.f32 %v1989, %v1699
        %v2006 = vmul.f32 %v1990, %v1699
        %v2007 = vmul.f32 %v1991, %v1699
        %v2008 = vsub.f32 %v1992, %v1569
        %v2009 = vsub.f32 %v1993, %v1570
        %v2010 = vsub.f32 %v1994, %v1571
        %v2011 = vsub.f32 %v1995, %v1572
        %v2012 = vsub.f32 %v1996, %v1573
        %v2013 = vsub.f32 %v1997, %v1574
        %v2014 = vsub.f32 %v1998, %v1575
        %v2015 = vsub.f32 %v1999, %v1576
        %v2016 = vsub.f32 %v2000, %v1577
        %v2017 = vsub.f32 %v2001, %v1578
        %v2018 = vsub.f32 %v2002, %v1579
        %v2019 = vsub.f32 %v2003, %v1580
        %v2020 = vsub.f32 %v2004, %v1581
        %v2021 = vsub.f32 %v2005, %v1582
        %v2022 = vsub.f32 %v2006, %v1583
        %v2023 = vsub.f32 %v2007, %v1584
        %s2024 = scalar_lea.vmem %s377, 256 [#allocation6]
        %2025 = vst [vmem:[%s2024] sm:$0xff] %v2008
        %2026 = vst [vmem:[%s2024 + $0x8] sm:$0xff] %v2009
        %2027 = vst [vmem:[%s2024 + $0x10] sm:$0xff] %v2010
        %2028 = vst [vmem:[%s2024 + $0x18] sm:$0xff] %v2011
        %2029 = vst [vmem:[%s2024 + $0x20] sm:$0xff] %v2012
        %2030 = vst [vmem:[%s2024 + $0x28] sm:$0xff] %v2013
        %2031 = vst [vmem:[%s2024 + $0x30] sm:$0xff] %v2014
        %2032 = vst [vmem:[%s2024 + $0x38] sm:$0xff] %v2015
        %2033 = vst [vmem:[%s2024 + $0x40] sm:$0xff] %v2016
        %2034 = vst [vmem:[%s2024 + $0x48] sm:$0xff] %v2017
        %2035 = vst [vmem:[%s2024 + $0x50] sm:$0xff] %v2018
        %2036 = vst [vmem:[%s2024 + $0x58] sm:$0xff] %v2019
        %2037 = vst [vmem:[%s2024 + $0x60] sm:$0xff] %v2020
        %2038 = vst [vmem:[%s2024 + $0x68] sm:$0xff] %v2021
        %2039 = vst [vmem:[%s2024 + $0x70] sm:$0xff] %v2022
        %2040 = vst [vmem:[%s2024 + $0x78] sm:$0xff] %v2023
        %v2041 = vperm.slane %v1477, 3
        %v2042 = vadd.f32 %v1438, %v2041
        %v2043 = vadd.f32 %v1440, %v2041
        %v2044 = vadd.f32 %v1443, %v2041
        %v2045 = vadd.f32 %v1445, %v2041
        %v2046 = vadd.f32 %v1448, %v2041
        %v2047 = vadd.f32 %v1450, %v2041
        %v2048 = vadd.f32 %v1453, %v2041
        %v2049 = vadd.f32 %v1455, %v2041
        %v2050 = vadd.f32 %v1458, %v2041
        %v2051 = vadd.f32 %v1460, %v2041
        %v2052 = vadd.f32 %v1463, %v2041
        %v2053 = vadd.f32 %v1465, %v2041
        %v2054 = vadd.f32 %v1468, %v2041
        %v2055 = vadd.f32 %v1470, %v2041
        %v2056 = vadd.f32 %v1473, %v2041
        %v2057 = vadd.f32 %v1475, %v2041
        %2058 = vset.pattern.permute.xlu0 3
        %2059 = vperm.xlu0 %2058, %v1479
        %v2060 = vpop.permute.xlu0 %2059
        %2062 = vset.pattern.permute.xlu0 3
        %2063 = vperm.xlu0 %2062, %v1480
        %v2064 = vpop.permute.xlu0 %2063
        %2066 = vset.pattern.permute.xlu0 3
        %2067 = vperm.xlu0 %2066, %v1481
        %v2068 = vpop.permute.xlu0 %2067
        %2070 = vset.pattern.permute.xlu0 3
        %2071 = vperm.xlu0 %2070, %v1482
        %v2072 = vpop.permute.xlu0 %2071
        %2074 = vset.pattern.permute.xlu0 3
        %2075 = vperm.xlu0 %2074, %v1483
        %v2076 = vpop.permute.xlu0 %2075
        %2078 = vset.pattern.permute.xlu0 3
        %2079 = vperm.xlu0 %2078, %v1484
        %v2080 = vpop.permute.xlu0 %2079
        %2082 = vset.pattern.permute.xlu0 3
        %2083 = vperm.xlu0 %2082, %v1485
        %v2084 = vpop.permute.xlu0 %2083
        %2086 = vset.pattern.permute.xlu0 3
        %2087 = vperm.xlu0 %2086, %v1486
        %v2088 = vpop.permute.xlu0 %2087
        %2090 = vset.pattern.permute.xlu0 3
        %2091 = vperm.xlu0 %2090, %v1487
        %v2092 = vpop.permute.xlu0 %2091
        %2094 = vset.pattern.permute.xlu0 3
        %2095 = vperm.xlu0 %2094, %v1488
        %v2096 = vpop.permute.xlu0 %2095
        %2098 = vset.pattern.permute.xlu0 3
        %2099 = vperm.xlu0 %2098, %v1489
        %v2100 = vpop.permute.xlu0 %2099
        %2102 = vset.pattern.permute.xlu0 3
        %2103 = vperm.xlu0 %2102, %v1490
        %v2104 = vpop.permute.xlu0 %2103
        %2106 = vset.pattern.permute.xlu0 3
        %2107 = vperm.xlu0 %2106, %v1491
        %v2108 = vpop.permute.xlu0 %2107
        %2110 = vset.pattern.permute.xlu0 3
        %2111 = vperm.xlu0 %2110, %v1492
        %v2112 = vpop.permute.xlu0 %2111
        %2114 = vset.pattern.permute.xlu0 3
        %2115 = vperm.xlu0 %2114, %v1493
        %v2116 = vpop.permute.xlu0 %2115
        %2118 = vset.pattern.permute.xlu0 3
        %2119 = vperm.xlu0 %2118, %v1494
        %v2120 = vpop.permute.xlu0 %2119
        %v2122 = vadd.f32 %v2042, %v2060
        %v2123 = vadd.f32 %v2043, %v2064
        %v2124 = vadd.f32 %v2044, %v2068
        %v2125 = vadd.f32 %v2045, %v2072
        %v2126 = vadd.f32 %v2046, %v2076
        %v2127 = vadd.f32 %v2047, %v2080
        %v2128 = vadd.f32 %v2048, %v2084
        %v2129 = vadd.f32 %v2049, %v2088
        %v2130 = vadd.f32 %v2050, %v2092
        %v2131 = vadd.f32 %v2051, %v2096
        %v2132 = vadd.f32 %v2052, %v2100
        %v2133 = vadd.f32 %v2053, %v2104
        %v2134 = vadd.f32 %v2054, %v2108
        %v2135 = vadd.f32 %v2055, %v2112
        %v2136 = vadd.f32 %v2056, %v2116
        %v2137 = vadd.f32 %v2057, %v2120
        %v2138 = vmul.f32 %v2122, %v1699
        %v2139 = vmul.f32 %v2123, %v1699
        %v2140 = vmul.f32 %v2124, %v1699
        %v2141 = vmul.f32 %v2125, %v1699
        %v2142 = vmul.f32 %v2126, %v1699
        %v2143 = vmul.f32 %v2127, %v1699
        %v2144 = vmul.f32 %v2128, %v1699
        %v2145 = vmul.f32 %v2129, %v1699
        %v2146 = vmul.f32 %v2130, %v1699
        %v2147 = vmul.f32 %v2131, %v1699
        %v2148 = vmul.f32 %v2132, %v1699
        %v2149 = vmul.f32 %v2133, %v1699
        %v2150 = vmul.f32 %v2134, %v1699
        %v2151 = vmul.f32 %v2135, %v1699
        %v2152 = vmul.f32 %v2136, %v1699
        %v2153 = vmul.f32 %v2137, %v1699
        %v2154 = vsub.f32 %v2138, %v1569
        %v2155 = vsub.f32 %v2139, %v1570
        %v2156 = vsub.f32 %v2140, %v1571
        %v2157 = vsub.f32 %v2141, %v1572
        %v2158 = vsub.f32 %v2142, %v1573
        %v2159 = vsub.f32 %v2143, %v1574
        %v2160 = vsub.f32 %v2144, %v1575
        %v2161 = vsub.f32 %v2145, %v1576
        %v2162 = vsub.f32 %v2146, %v1577
        %v2163 = vsub.f32 %v2147, %v1578
        %v2164 = vsub.f32 %v2148, %v1579
        %v2165 = vsub.f32 %v2149, %v1580
        %v2166 = vsub.f32 %v2150, %v1581
        %v2167 = vsub.f32 %v2151, %v1582
        %v2168 = vsub.f32 %v2152, %v1583
        %v2169 = vsub.f32 %v2153, %v1584
        %s2170 = scalar_lea.vmem %s377, 384 [#allocation6]
        %2171 = vst [vmem:[%s2170] sm:$0xff] %v2154
        %2172 = vst [vmem:[%s2170 + $0x8] sm:$0xff] %v2155
        %2173 = vst [vmem:[%s2170 + $0x10] sm:$0xff] %v2156
        %2174 = vst [vmem:[%s2170 + $0x18] sm:$0xff] %v2157
        %2175 = vst [vmem:[%s2170 + $0x20] sm:$0xff] %v2158
        %2176 = vst [vmem:[%s2170 + $0x28] sm:$0xff] %v2159
        %2177 = vst [vmem:[%s2170 + $0x30] sm:$0xff] %v2160
        %2178 = vst [vmem:[%s2170 + $0x38] sm:$0xff] %v2161
        %2179 = vst [vmem:[%s2170 + $0x40] sm:$0xff] %v2162
        %2180 = vst [vmem:[%s2170 + $0x48] sm:$0xff] %v2163
        %2181 = vst [vmem:[%s2170 + $0x50] sm:$0xff] %v2164
        %2182 = vst [vmem:[%s2170 + $0x58] sm:$0xff] %v2165
        %2183 = vst [vmem:[%s2170 + $0x60] sm:$0xff] %v2166
        %2184 = vst [vmem:[%s2170 + $0x68] sm:$0xff] %v2167
        %2185 = vst [vmem:[%s2170 + $0x70] sm:$0xff] %v2168
        %2186 = vst [vmem:[%s2170 + $0x78] sm:$0xff] %v2169
        %s2187 = sand.u32 %s266, 1
        %s2188 = scalar_lea.sflag [#allocation7], %s2187
        %s2189 = sand.u32 %s266, 1
        %s2190 = smul.addr %s2189, 512
        %s2191 = scalar_lea.vmem [#allocation6], %s2190
        // Predicated region
        $region65: #{tpu_custom_call.1} parent=59 // pred_check
          %p2192 = pneg %p276
        $region66: #{tpu_custom_call.1} parent=59 // pred_check_branch
          %2194 = sbr.rel (%p2192) target = $region68
        $region67: #{tpu_custom_call.1} parent=59 // pred_region
          %s2195 = smul.u32 16, %s29
          %2197 = vsyncadd %s2188, 0
          %s2198 = smul.addr %s28, 64
          %s2199 = sadd.s32 %s2195, %s2198
          %s2200 = smul.addr %s2199, 8
          %s2201 = scalar_lea.hbm %s10, %s2200
          %s2202 = sshll.u32 %s2191, 4
          %s2203 = int_to_ptr.vmem [resolvable:$true] %s2202
          %s2204 = sshll.u32 %s2201, 4
          %s2205 = int_to_ptr.hbm [resolvable:$true] %s2204
          %2210 = dma.vmem_to_hbm [thread:$0]  %s2203, 8192, %s2205, %s2188, 128, 128, 8
        $region68: #{tpu_custom_call.1} parent=59 // pred_fallthru
          _
      $region60: #{tpu_custom_call.1} parent=5 // pred_fallthru
        _
      %p2211 = scmp.le.s32.totalorder 2, %s19
      // Predicated region
      $region69: #{tpu_custom_call.1} parent=5 // pred_check
        %p2212 = pneg %p2211
      $region70: #{tpu_custom_call.1} parent=5 // pred_check_branch
        %2214 = sbr.rel (%p2212) target = $region72
      $region71: #{tpu_custom_call.1} parent=5 // pred_region
        %s2215 = ssub.s32 %s19, 2
        // Predicated region
        $region73: #{tpu_custom_call.1} parent=71 // pred_check
          %p2216 = pneg %p282
        $region74: #{tpu_custom_call.1} parent=71 // pred_check_branch
          %2218 = sbr.rel (%p2216) target = $region76
        $region75: #{tpu_custom_call.1} parent=71 // pred_region
          %s2219 = sand.u32 %s267, 1
          %s2220 = scalar_lea.sflag [#allocation7], %s2219
          %s2221 = sand.u32 %s267, 1
          %s2222 = smul.addr %s2221, 512
          %s2223 = scalar_lea.vmem [#allocation6], %s2222
          %2225 = dma.done %s2220, 8192
        $region76: #{tpu_custom_call.1} parent=71 // pred_fallthru
          _
      $region72: #{tpu_custom_call.1} parent=5 // pred_fallthru
        _
    $region6: #{tpu_custom_call.1} parent=1 // loop_footer
      %s23 = sadd.s32 1, %s19
    $region7: #{tpu_custom_call.1} parent=1 // loop_footer_branch
      %18 = sbr.rel target = $region3
    $region8: #{tpu_custom_call.1} parent=1 // loop_exit
      _
    %2226 = vsyncpa [#allocation7], 1
    %s2227 = scalar_lea.sflag [#allocation7], 1
    %2228 = vsyncpa %s2227, 1

</llo_original>
